<compile_context>
chip_gen: v7x
topology: tpu7x:2x2x1
jax: 0.10.0
libtpu: 0.0.40
codegen_flags: <defaults>
</compile_context>

<pallas_src>
import math

import numpy as np
import jax
import jax.numpy as jnp
from jax.experimental import pallas as pl
from jax.experimental.pallas import tpu as pltpu


# ---------------------------------------------------------------------------
# helpers (trace-time / numpy only)
# ---------------------------------------------------------------------------
def _round_up(n, m):
    return ((n + m - 1) // m) * m


def _conv_out(size, k, stride, pad):
    return (size + 2 * pad - k) // stride + 1


def im2col(x_nhwc, kh, kw, stride, pad):
    """(B, H, W, C) -> (B, OH*OW, KH*KW*C) conv patches (pure indexing)."""
    x = jnp.pad(x_nhwc, ((0, 0), (pad, pad), (pad, pad), (0, 0)))
    B, H, W, C = x.shape
    oh = (H - kh) // stride + 1
    ow = (W - kw) // stride + 1
    patches = []
    for i in range(kh):
        for j in range(kw):
            patches.append(
                x[:, i: i + (oh - 1) * stride + 1: stride,
                     j: j + (ow - 1) * stride + 1: stride, :])
    p = jnp.stack(patches, axis=3)                       # (B, OH, OW, KH*KW, C)
    return p.reshape(B, oh * ow, kh * kw * C), oh, ow


def _stacked_gather(ih, iw, kh, kw, stride, pad, m_in_pad, m_out_pad):
    """Per-image 0/1 gather: S[kp*m_out_pad + o, i] = 1 iff tap kp of output row o
    reads input row i.  Out-of-range taps / padded output rows stay all-zero, so
    they contribute exactly 0 downstream (zero-padding semantics)."""
    oh = _conv_out(ih, kh, stride, pad)
    ow = _conv_out(iw, kw, stride, pad)
    S = np.zeros((kh * kw * m_out_pad, m_in_pad), np.float32)
    for oi in range(oh):
        for oj in range(ow):
            o = oi * ow + oj
            for ki in range(kh):
                for kj in range(kw):
                    ii = oi * stride - pad + ki
                    jj = oj * stride - pad + kj
                    if 0 <= ii < ih and 0 <= jj < iw:
                        S[(ki * kw + kj) * m_out_pad + o, ii * iw + jj] = 1.0
    return S, oh, ow


# ---------------------------------------------------------------------------
# parameter init (Xavier-uniform weights, matching the PyTorch module's shapes)
# ---------------------------------------------------------------------------
def _xavier(key, shape, fan_in, fan_out):
    bound = math.sqrt(6.0 / (fan_in + fan_out))
    return jax.random.uniform(key, shape, jnp.float32, minval=-bound, maxval=bound)


def _conv_weight(key, oc, ic, kh, kw):
    # PyTorch (OC, IC, KH, KW) -> (KH, KW, IC, OC) -> (KH*KW*IC, OC)
    w = _xavier(key, (oc, ic, kh, kw), fan_in=ic * kh * kw, fan_out=oc * kh * kw)
    return jnp.transpose(w, (2, 3, 1, 0)).reshape(kh * kw * ic, oc)


def _linear_weight(key, in_dim, out_dim):
    w = _xavier(key, (out_dim, in_dim), fan_in=in_dim, fan_out=out_dim)
    return jnp.transpose(w, (1, 0))


def init_params(key, action_dim=2, cnn_output_dim=128, scalar_output_dim=64):
    ks = jax.random.split(key, 8)
    return {
        "conv1_w": _conv_weight(ks[0], 32, 1, 8, 8), "conv1_b": jnp.zeros((32,), jnp.float32),
        "conv2_w": _conv_weight(ks[1], 64, 32, 4, 4), "conv2_b": jnp.zeros((64,), jnp.float32),
        "conv3_w": _conv_weight(ks[2], 64, 64, 3, 3), "conv3_b": jnp.zeros((64,), jnp.float32),
        "cnn_fc_w": _linear_weight(ks[3], 64, cnn_output_dim),
        "cnn_fc_b": jnp.zeros((cnn_output_dim,), jnp.float32),
        "s1_w": _linear_weight(ks[4], 16, 64), "s1_b": jnp.zeros((64,), jnp.float32),
        "s2_w": _linear_weight(ks[5], 64, scalar_output_dim),
        "s2_b": jnp.zeros((scalar_output_dim,), jnp.float32),
        "fc1_w": _linear_weight(ks[6], cnn_output_dim + scalar_output_dim, 256),
        "fc1_b": jnp.zeros((256,), jnp.float32),
        "fc2_w": _linear_weight(ks[7], 256, action_dim),
        "fc2_b": jnp.zeros((action_dim,), jnp.float32),
    }


# ---------------------------------------------------------------------------
# fused forward pass: one pallas_call, grid over the batch ("parallel")
# ---------------------------------------------------------------------------
def improved_actor_forward(params, img_nchw, scalars):
    f32 = jnp.float32
    x = jnp.transpose(img_nchw, (0, 2, 3, 1)).astype(f32)          # NCHW -> NHWC
    B = x.shape[0]
    action_dim = params["fc2_w"].shape[1]
    cnn_dim = params["cnn_fc_w"].shape[1]
    scl_in = params["s1_w"].shape[0]

    # --- conv geometry (static) ---
    c1 = params["conv1_w"].shape[1]                                 # 32
    c2 = params["conv2_w"].shape[1]                                 # 64
    c3 = params["conv3_w"].shape[1]                                 # 64
    kp2 = params["conv2_w"].shape[0] // c1                          # 16
    kp3 = params["conv3_w"].shape[0] // c2                          # 9

    p1, oh1, ow1 = im2col(x, 8, 8, 4, 0)                            # (B, 49, 64)
    m1 = oh1 * ow1
    m1p = _round_up(m1, 8)                                          # 56
    p1 = jnp.pad(p1, ((0, 0), (0, m1p - m1), (0, 0)))               # (B, 56, 64)

    oh2, ow2 = _conv_out(oh1, 4, 2, 1), _conv_out(ow1, 4, 2, 1)     # 3, 3
    m2p = _round_up(oh2 * ow2, 8)                                   # 16
    oh3, ow3 = _conv_out(oh2, 3, 1, 1), _conv_out(ow2, 3, 1, 1)     # 3, 3
    m3p = _round_up(oh3 * ow3, 8)                                   # 16
    n_pool = oh3 * ow3                                              # 9

    # kernel-position group sizes: per-group matmul result stays <= ~64 KB
    grp2, grp3 = 4, 3
    assert kp2 % grp2 == 0 and kp3 % grp3 == 0

    # --- slab 1: per-image stacked gather matrices (constant, O(1) in batch) ---
    S2, _, _ = _stacked_gather(oh1, ow1, 4, 4, 2, 1, m1p, m2p)      # (256, 56)
    S3, _, _ = _stacked_gather(oh2, ow2, 3, 3, 1, 1, m2p, m3p)      # (144, 16)
    gath_np = np.zeros((S2.shape[0] + S3.shape[0],
                        max(S2.shape[1], S3.shape[1])), np.float32)
    gath_np[:S2.shape[0], :S2.shape[1]] = S2
    gath_np[S2.shape[0]:, :S3.shape[1]] = S3
    gath = jnp.asarray(gath_np)
    s2_rows, s2_cols = S2.shape
    s3_rows, s3_cols = S3.shape

    # --- slab 2: conv2/conv3 weights, per-kernel-position blocks concatenated along OC ---
    w2cat = jnp.transpose(params["conv2_w"].reshape(kp2, c1, c2),
                          (1, 0, 2)).reshape(c1, kp2 * c2)          # (32, 1024)
    w3cat = jnp.transpose(params["conv3_w"].reshape(kp3, c2, c3),
                          (1, 0, 2)).reshape(c2, kp3 * c3)          # (64, 576)
    wconv = jnp.zeros((c1 + c2, max(kp2 * c2, kp3 * c3)), f32)
    wconv = wconv.at[:c1, :kp2 * c2].set(w2cat)
    wconv = wconv.at[c1:, :kp3 * c3].set(w3cat)

    # --- slab 3: conv1 + all small FC weights, row-stacked at 8-aligned offsets ---
    fc_parts = [
        params["conv1_w"],                 # 0: (64, 32)
        params["cnn_fc_w"],                # 1: (64, 128)
        params["s1_w"],                    # 2: (16, 64)
        params["s2_w"],                    # 3: (64, 64)
        params["fc1_w"][:cnn_dim],         # 4: (128, 256)  cnn half of fc1
        params["fc1_w"][cnn_dim:],         # 5: (64, 256)   scalar half of fc1
        params["fc2_w"],                   # 6: (256, action_dim)
    ]
    fc_off, r = [], 0
    for pz in fc_parts:
        fc_off.append((r, pz.shape[0], pz.shape[1]))
        r += _round_up(pz.shape[0], 8)
    wfc = jnp.zeros((r, max(pz.shape[1] for pz in fc_parts)), f32)
    for (ro, nr, nc), pz in zip(fc_off, fc_parts):
        wfc = wfc.at[ro:ro + nr, :nc].set(pz)

    # --- slab 4: every bias in its own 128-lane-aligned slot of one row ---
    b_parts = [params["conv1_b"], params["conv2_b"], params["conv3_b"],
               params["cnn_fc_b"], params["s1_b"], params["s2_b"],
               params["fc1_b"], params["fc2_b"]]
    b_off, col = [], 0
    for bz in b_parts:
        b_off.append((col, bz.shape[0]))
        col += _round_up(bz.shape[0], 128)
    bias = jnp.zeros((1, col), f32)
    for (co, n), bz in zip(b_off, b_parts):
        bias = bias.at[0, co:co + n].set(bz)

    scal = scalars.astype(f32).reshape(B, 1, scl_in)

    # -----------------------------------------------------------------------
    # the kernel (closure over the static layout above)
    # -----------------------------------------------------------------------
    def kernel(p1_ref, sc_ref, gath_ref, wconv_ref, wfc_ref, bias_ref, o_ref):
        dot = lambda a, b: jnp.dot(a, b, preferred_element_type=jnp.float32)
        relu = lambda v: jnp.maximum(v, 0.0)

        def fc_w(i):
            ro, nr, nc = fc_off[i]
            return wfc_ref[ro:ro + nr, 0:nc]

        def bia(i):
            co, n = b_off[i]
            return bias_ref[0:1, co:co + n]

        def conv_gathered(y_in, g_row0, n_rows, n_cols, w_row0, cin, cout,
                          kp, m_out, grp, b):
            # one stacked-gather matmul collects every (tap, output-row) pair ...
            g = dot(gath_ref[g_row0:g_row0 + n_rows, 0:n_cols], y_in)   # (kp*m_out, cin)
            acc = jnp.zeros((m_out, cout), jnp.float32)
            # ... then a few lane-dense weight matmuls + diagonal-block sums
            for gi in range(kp // grp):
                r0, cc0 = gi * grp * m_out, gi * grp * cout
                hg = dot(g[r0:r0 + grp * m_out, :],
                         wconv_ref[w_row0:w_row0 + cin, cc0:cc0 + grp * cout])
                for j in range(grp):
                    acc = acc + hg[j * m_out:(j + 1) * m_out,
                                   j * cout:(j + 1) * cout]
            return relu(acc + b)

        # conv1 (im2col patches prepared in the wrapper)
        y1 = relu(dot(p1_ref[0], fc_w(0)) + bia(0))                     # (56, 32)
        # conv2 / conv3 (padded rows hold relu(bias); never read downstream)
        y2 = conv_gathered(y1, 0, s2_rows, s2_cols, 0, c1, c2,
                           kp2, m2p, grp2, bia(1))                      # (16, 64)
        y3 = conv_gathered(y2, s2_rows, s3_rows, s3_cols, c1, c2, c3,
                           kp3, m3p, grp3, bia(2))                      # (16, 64)

        # AdaptiveAvgPool2d((1,1)) + flatten: masked mean over the 9 valid rows
        ridx = jax.lax.broadcasted_iota(jnp.int32, (m3p, 1), 0)
        pooled = jnp.sum(jnp.where(ridx < n_pool, y3, 0.0),
                         axis=0, keepdims=True) * (1.0 / n_pool)        # (1, 64)

        cnn = relu(dot(pooled, fc_w(1)) + bia(3))                       # (1, 128)

        s = relu(dot(sc_ref[0], fc_w(2)) + bia(4))                      # (1, 64)
        s = relu(dot(s, fc_w(3)) + bia(5))                              # (1, 64)

        # torch.cat([cnn, s]) @ fc1  ==  cnn @ fc1a + s @ fc1b
        h = relu(dot(cnn, fc_w(4)) + dot(s, fc_w(5)) + bia(6))          # (1, 256)
        o_ref[0] = jnp.tanh(dot(h, fc_w(6)) + bia(7))                   # (1, action_dim)

    out = pl.pallas_call(
        kernel,
        out_shape=jax.ShapeDtypeStruct((B, 1, action_dim), f32),
        grid=(B,),
        in_specs=[
            pl.BlockSpec((1, m1p, p1.shape[2]), lambda b: (b, 0, 0)),   # per-image patches
            pl.BlockSpec((1, 1, scl_in), lambda b: (b, 0, 0)),          # per-image scalars
            pl.BlockSpec(gath.shape, lambda b: (0, 0)),                 # constant slabs:
            pl.BlockSpec(wconv.shape, lambda b: (0, 0)),                #   block index is
            pl.BlockSpec(wfc.shape, lambda b: (0, 0)),                  #   fixed, so they
            pl.BlockSpec(bias.shape, lambda b: (0, 0)),                 #   are fetched once
        ],
        out_specs=pl.BlockSpec((1, 1, action_dim), lambda b: (b, 0, 0)),
        compiler_params=pltpu.CompilerParams(
            dimension_semantics=("parallel",),          # megacore split on v7x
        ),
    )(p1, scal, gath, wconv, wfc, bias)

    return out.reshape(B, action_dim)


# ---------------------------------------------------------------------------
# pure-JAX reference (lax.conv, HIGHEST precision) for the correctness check
# ---------------------------------------------------------------------------
def _reference_forward(params, img_nchw, scalars):
    hi = jax.lax.Precision.HIGHEST
    x = img_nchw.astype(jnp.float32)

    def conv(x, w_flat, b, ic, oc, kh, kw, stride, pad):
        w = w_flat.reshape(kh, kw, ic, oc)  # HWIO
        y = jax.lax.conv_general_dilated(
            x, w, (stride, stride), [(pad, pad), (pad, pad)],
            dimension_numbers=("NCHW", "HWIO", "NCHW"), precision=hi)
        return jnp.maximum(y + b.reshape(1, oc, 1, 1), 0.0)

    x = conv(x, params["conv1_w"], params["conv1_b"], 1, 32, 8, 8, 4, 0)
    x = conv(x, params["conv2_w"], params["conv2_b"], 32, 64, 4, 4, 2, 1)
    x = conv(x, params["conv3_w"], params["conv3_b"], 64, 64, 3, 3, 1, 1)
    pooled = jnp.mean(x, axis=(2, 3))
    dot = lambda a, b: jnp.dot(a, b, precision=hi)
    cnn = jnp.maximum(dot(pooled, params["cnn_fc_w"]) + params["cnn_fc_b"], 0.0)
    s = jnp.maximum(dot(scalars, params["s1_w"]) + params["s1_b"], 0.0)
    s = jnp.maximum(dot(s, params["s2_w"]) + params["s2_b"], 0.0)
    h = jnp.maximum(dot(jnp.concatenate([cnn, s], axis=1), params["fc1_w"])
                    + params["fc1_b"], 0.0)
    return jnp.tanh(dot(h, params["fc2_w"]) + params["fc2_b"])


if __name__ == "__main__":
    key = jax.random.PRNGKey(0)
    k_param, k_img, k_scalar, k_bias = jax.random.split(key, 4)

    params = init_params(k_param)
    # The PyTorch module zero-inits biases; use small non-zero ones here to also
    # exercise the padded-row invariant flagged in review (padding holds relu(b)).
    for i, name in enumerate(sorted(k for k in params if k.endswith("_b"))):
        params[name] = 0.05 * jax.random.normal(
            jax.random.fold_in(k_bias, i), params[name].shape, jnp.float32)

    # batch=2, 1-channel 32x32 image, 16 scalar features (matches the module)
    img = jax.random.normal(k_img, (2, 1, 32, 32), jnp.float32)       # NCHW
    scalars = jax.random.normal(k_scalar, (2, 16), jnp.float32)

    out = jax.jit(improved_actor_forward)(params, img, scalars)
    out = jax.block_until_ready(out)

    assert out.shape == (2, 2), out.shape
    assert bool(jnp.all(jnp.isfinite(out)))
    assert bool(jnp.all(jnp.abs(out) <= 1.0 + 1e-6))   # tanh output range

    # cross-check; loose tol covers the MXU's default f32 (bf16-pass) matmul path
    # vs the HIGHEST-precision reference
    ref = _reference_forward(params, img, scalars)
    err = float(jnp.max(jnp.abs(out - ref)))
    assert err < 2e-2, f"mismatch vs reference: {err}"

    print("KERNEL_OK")
</pallas_src>

<mosaic_0001>
module attributes {stable_mosaic.version = 11 : i64} {
  func.func @kernel(%arg0: i32, %arg1: memref<1x56x64xf32, #tpu.memory_space<vmem>>, %arg2: memref<1x1x16xf32, #tpu.memory_space<vmem>>, %arg3: memref<400x56xf32, #tpu.memory_space<vmem>>, %arg4: memref<96x1024xf32, #tpu.memory_space<vmem>>, %arg5: memref<656x256xf32, #tpu.memory_space<vmem>>, %arg6: memref<1x1152xf32, #tpu.memory_space<vmem>>, %arg7: memref<1x1x2xf32, #tpu.memory_space<vmem>>) attributes {dimension_semantics = [#tpu.dimension_semantics<parallel>], iteration_bounds = array<i64: 2>, scalar_prefetch = 0 : i64, scratch_operands = 0 : i64, tpu.core_type = #tpu.core_type<tc>, window_params = [{transform_indices = @transform_0, window_bounds = array<i64: 1, 56, 64>}, {transform_indices = @transform_1, window_bounds = array<i64: 1, 1, 16>}, {pipeline_mode = #tpu.pipeline_mode<synchronous>, transform_indices = @transform_2, window_bounds = array<i64: 400, 56>}, {pipeline_mode = #tpu.pipeline_mode<synchronous>, transform_indices = @transform_3, window_bounds = array<i64: 96, 1024>}, {pipeline_mode = #tpu.pipeline_mode<synchronous>, transform_indices = @transform_4, window_bounds = array<i64: 656, 256>}, {pipeline_mode = #tpu.pipeline_mode<synchronous>, transform_indices = @transform_5, window_bounds = array<i64: 1, 1152>}, {transform_indices = @transform_6, window_bounds = array<i64: 1, 1, 2>}]} {
    %c0 = arith.constant 0 : index
    %c0_0 = arith.constant 0 : index
    %c0_1 = arith.constant 0 : index
    %0 = vector.load %arg1[%c0, %c0_0, %c0_1] : memref<1x56x64xf32, #tpu.memory_space<vmem>>, vector<1x56x64xf32>
    %1 = vector.shape_cast %0 : vector<1x56x64xf32> to vector<56x64xf32>
    %c0_2 = arith.constant 0 : index
    %c0_3 = arith.constant 0 : index
    %2 = vector.load %arg5[%c0_2, %c0_3] : memref<656x256xf32, #tpu.memory_space<vmem>>, vector<64x32xf32>
    %cst = arith.constant dense<0.000000e+00> : vector<56x32xf32>
    %3 = tpu.matmul %1, %2, %cst {dimension_numbers = #tpu.dot_dimension_numbers<[1], [0], [0], [1], [0, 0, 1, 1], [], []>} : vector<56x64xf32>, vector<64x32xf32>, vector<56x32xf32> -> vector<56x32xf32>
    %c0_4 = arith.constant 0 : index
    %c0_5 = arith.constant 0 : index
    %4 = vector.load %arg6[%c0_4, %c0_5] : memref<1x1152xf32, #tpu.memory_space<vmem>>, vector<1x32xf32>
    %5 = vector.broadcast %4 : vector<1x32xf32> to vector<56x32xf32>
    %6 = arith.addf %3, %5 : vector<56x32xf32>
    %cst_6 = arith.constant 0.000000e+00 : f32
    %7 = vector.broadcast %cst_6 : f32 to vector<56x32xf32>
    %8 = arith.maximumf %6, %7 : vector<56x32xf32>
    %c0_7 = arith.constant 0 : index
    %c128 = arith.constant 128 : index
    %9 = vector.load %arg6[%c0_7, %c128] : memref<1x1152xf32, #tpu.memory_space<vmem>>, vector<1x64xf32>
    %c0_8 = arith.constant 0 : index
    %c0_9 = arith.constant 0 : index
    %10 = vector.load %arg3[%c0_8, %c0_9] : memref<400x56xf32, #tpu.memory_space<vmem>>, vector<256x56xf32>
    %cst_10 = arith.constant dense<0.000000e+00> : vector<256x32xf32>
    %11 = tpu.matmul %10, %8, %cst_10 {dimension_numbers = #tpu.dot_dimension_numbers<[1], [0], [0], [1], [0, 0, 1, 1], [], []>} : vector<256x56xf32>, vector<56x32xf32>, vector<256x32xf32> -> vector<256x32xf32>
    %cst_11 = arith.constant 0.000000e+00 : f32
    %12 = vector.broadcast %cst_11 : f32 to vector<16x64xf32>
    %13 = vector.extract_strided_slice %11 {offsets = [0, 0], sizes = [64, 32], strides = [1, 1]} : vector<256x32xf32> to vector<64x32xf32>
    %c0_12 = arith.constant 0 : index
    %c0_13 = arith.constant 0 : index
    %14 = vector.load %arg4[%c0_12, %c0_13] : memref<96x1024xf32, #tpu.memory_space<vmem>>, vector<32x256xf32>
    %cst_14 = arith.constant dense<0.000000e+00> : vector<64x256xf32>
    %15 = tpu.matmul %13, %14, %cst_14 {dimension_numbers = #tpu.dot_dimension_numbers<[1], [0], [0], [1], [0, 0, 1, 1], [], []>} : vector<64x32xf32>, vector<32x256xf32>, vector<64x256xf32> -> vector<64x256xf32>
    %16 = vector.extract_strided_slice %15 {offsets = [0, 0], sizes = [16, 64], strides = [1, 1]} : vector<64x256xf32> to vector<16x64xf32>
    %17 = arith.addf %12, %16 : vector<16x64xf32>
    %18 = vector.extract_strided_slice %15 {offsets = [16, 64], sizes = [16, 64], strides = [1, 1]} : vector<64x256xf32> to vector<16x64xf32>
    %19 = arith.addf %17, %18 : vector<16x64xf32>
    %20 = vector.extract_strided_slice %15 {offsets = [32, 128], sizes = [16, 64], strides = [1, 1]} : vector<64x256xf32> to vector<16x64xf32>
    %21 = arith.addf %19, %20 : vector<16x64xf32>
    %22 = vector.extract_strided_slice %15 {offsets = [48, 192], sizes = [16, 64], strides = [1, 1]} : vector<64x256xf32> to vector<16x64xf32>
    %23 = arith.addf %21, %22 : vector<16x64xf32>
    %24 = vector.extract_strided_slice %11 {offsets = [64, 0], sizes = [64, 32], strides = [1, 1]} : vector<256x32xf32> to vector<64x32xf32>
    %c0_15 = arith.constant 0 : index
    %c256 = arith.constant 256 : index
    %25 = vector.load %arg4[%c0_15, %c256] : memref<96x1024xf32, #tpu.memory_space<vmem>>, vector<32x256xf32>
    %cst_16 = arith.constant dense<0.000000e+00> : vector<64x256xf32>
    %26 = tpu.matmul %24, %25, %cst_16 {dimension_numbers = #tpu.dot_dimension_numbers<[1], [0], [0], [1], [0, 0, 1, 1], [], []>} : vector<64x32xf32>, vector<32x256xf32>, vector<64x256xf32> -> vector<64x256xf32>
    %27 = vector.extract_strided_slice %26 {offsets = [0, 0], sizes = [16, 64], strides = [1, 1]} : vector<64x256xf32> to vector<16x64xf32>
    %28 = arith.addf %23, %27 : vector<16x64xf32>
    %29 = vector.extract_strided_slice %26 {offsets = [16, 64], sizes = [16, 64], strides = [1, 1]} : vector<64x256xf32> to vector<16x64xf32>
    %30 = arith.addf %28, %29 : vector<16x64xf32>
    %31 = vector.extract_strided_slice %26 {offsets = [32, 128], sizes = [16, 64], strides = [1, 1]} : vector<64x256xf32> to vector<16x64xf32>
    %32 = arith.addf %30, %31 : vector<16x64xf32>
    %33 = vector.extract_strided_slice %26 {offsets = [48, 192], sizes = [16, 64], strides = [1, 1]} : vector<64x256xf32> to vector<16x64xf32>
    %34 = arith.addf %32, %33 : vector<16x64xf32>
    %35 = vector.extract_strided_slice %11 {offsets = [128, 0], sizes = [64, 32], strides = [1, 1]} : vector<256x32xf32> to vector<64x32xf32>
    %c0_17 = arith.constant 0 : index
    %c512 = arith.constant 512 : index
    %36 = vector.load %arg4[%c0_17, %c512] : memref<96x1024xf32, #tpu.memory_space<vmem>>, vector<32x256xf32>
    %cst_18 = arith.constant dense<0.000000e+00> : vector<64x256xf32>
    %37 = tpu.matmul %35, %36, %cst_18 {dimension_numbers = #tpu.dot_dimension_numbers<[1], [0], [0], [1], [0, 0, 1, 1], [], []>} : vector<64x32xf32>, vector<32x256xf32>, vector<64x256xf32> -> vector<64x256xf32>
    %38 = vector.extract_strided_slice %37 {offsets = [0, 0], sizes = [16, 64], strides = [1, 1]} : vector<64x256xf32> to vector<16x64xf32>
    %39 = arith.addf %34, %38 : vector<16x64xf32>
    %40 = vector.extract_strided_slice %37 {offsets = [16, 64], sizes = [16, 64], strides = [1, 1]} : vector<64x256xf32> to vector<16x64xf32>
    %41 = arith.addf %39, %40 : vector<16x64xf32>
    %42 = vector.extract_strided_slice %37 {offsets = [32, 128], sizes = [16, 64], strides = [1, 1]} : vector<64x256xf32> to vector<16x64xf32>
    %43 = arith.addf %41, %42 : vector<16x64xf32>
    %44 = vector.extract_strided_slice %37 {offsets = [48, 192], sizes = [16, 64], strides = [1, 1]} : vector<64x256xf32> to vector<16x64xf32>
    %45 = arith.addf %43, %44 : vector<16x64xf32>
    %46 = vector.extract_strided_slice %11 {offsets = [192, 0], sizes = [64, 32], strides = [1, 1]} : vector<256x32xf32> to vector<64x32xf32>
    %c0_19 = arith.constant 0 : index
    %c768 = arith.constant 768 : index
    %47 = vector.load %arg4[%c0_19, %c768] : memref<96x1024xf32, #tpu.memory_space<vmem>>, vector<32x256xf32>
    %cst_20 = arith.constant dense<0.000000e+00> : vector<64x256xf32>
    %48 = tpu.matmul %46, %47, %cst_20 {dimension_numbers = #tpu.dot_dimension_numbers<[1], [0], [0], [1], [0, 0, 1, 1], [], []>} : vector<64x32xf32>, vector<32x256xf32>, vector<64x256xf32> -> vector<64x256xf32>
    %49 = vector.extract_strided_slice %48 {offsets = [0, 0], sizes = [16, 64], strides = [1, 1]} : vector<64x256xf32> to vector<16x64xf32>
    %50 = arith.addf %45, %49 : vector<16x64xf32>
    %51 = vector.extract_strided_slice %48 {offsets = [16, 64], sizes = [16, 64], strides = [1, 1]} : vector<64x256xf32> to vector<16x64xf32>
    %52 = arith.addf %50, %51 : vector<16x64xf32>
    %53 = vector.extract_strided_slice %48 {offsets = [32, 128], sizes = [16, 64], strides = [1, 1]} : vector<64x256xf32> to vector<16x64xf32>
    %54 = arith.addf %52, %53 : vector<16x64xf32>
    %55 = vector.extract_strided_slice %48 {offsets = [48, 192], sizes = [16, 64], strides = [1, 1]} : vector<64x256xf32> to vector<16x64xf32>
    %56 = arith.addf %54, %55 : vector<16x64xf32>
    %57 = vector.broadcast %9 : vector<1x64xf32> to vector<16x64xf32>
    %58 = arith.addf %56, %57 : vector<16x64xf32>
    %cst_21 = arith.constant 0.000000e+00 : f32
    %59 = vector.broadcast %cst_21 : f32 to vector<16x64xf32>
    %60 = arith.maximumf %58, %59 : vector<16x64xf32>
    %c0_22 = arith.constant 0 : index
    %c256_23 = arith.constant 256 : index
    %61 = vector.load %arg6[%c0_22, %c256_23] : memref<1x1152xf32, #tpu.memory_space<vmem>>, vector<1x64xf32>
    %c256_24 = arith.constant 256 : index
    %c0_25 = arith.constant 0 : index
    %62 = vector.load %arg3[%c256_24, %c0_25] : memref<400x56xf32, #tpu.memory_space<vmem>>, vector<144x16xf32>
    %cst_26 = arith.constant dense<0.000000e+00> : vector<144x64xf32>
    %63 = tpu.matmul %62, %60, %cst_26 {dimension_numbers = #tpu.dot_dimension_numbers<[1], [0], [0], [1], [0, 0, 1, 1], [], []>} : vector<144x16xf32>, vector<16x64xf32>, vector<144x64xf32> -> vector<144x64xf32>
    %cst_27 = arith.constant 0.000000e+00 : f32
    %64 = vector.broadcast %cst_27 : f32 to vector<16x64xf32>
    %65 = vector.extract_strided_slice %63 {offsets = [0, 0], sizes = [48, 64], strides = [1, 1]} : vector<144x64xf32> to vector<48x64xf32>
    %c32 = arith.constant 32 : index
    %c0_28 = arith.constant 0 : index
    %66 = vector.load %arg4[%c32, %c0_28] : memref<96x1024xf32, #tpu.memory_space<vmem>>, vector<64x192xf32>
    %cst_29 = arith.constant dense<0.000000e+00> : vector<48x192xf32>
    %67 = tpu.matmul %65, %66, %cst_29 {dimension_numbers = #tpu.dot_dimension_numbers<[1], [0], [0], [1], [0, 0, 1, 1], [], []>} : vector<48x64xf32>, vector<64x192xf32>, vector<48x192xf32> -> vector<48x192xf32>
    %68 = vector.extract_strided_slice %67 {offsets = [0, 0], sizes = [16, 64], strides = [1, 1]} : vector<48x192xf32> to vector<16x64xf32>
    %69 = arith.addf %64, %68 : vector<16x64xf32>
    %70 = vector.extract_strided_slice %67 {offsets = [16, 64], sizes = [16, 64], strides = [1, 1]} : vector<48x192xf32> to vector<16x64xf32>
    %71 = arith.addf %69, %70 : vector<16x64xf32>
    %72 = vector.extract_strided_slice %67 {offsets = [32, 128], sizes = [16, 64], strides = [1, 1]} : vector<48x192xf32> to vector<16x64xf32>
    %73 = arith.addf %71, %72 : vector<16x64xf32>
    %74 = vector.extract_strided_slice %63 {offsets = [48, 0], sizes = [48, 64], strides = [1, 1]} : vector<144x64xf32> to vector<48x64xf32>
    %c32_30 = arith.constant 32 : index
    %c192 = arith.constant 192 : index
    %75 = vector.load %arg4[%c32_30, %c192] : memref<96x1024xf32, #tpu.memory_space<vmem>>, vector<64x192xf32>
    %cst_31 = arith.constant dense<0.000000e+00> : vector<48x192xf32>
    %76 = tpu.matmul %74, %75, %cst_31 {dimension_numbers = #tpu.dot_dimension_numbers<[1], [0], [0], [1], [0, 0, 1, 1], [], []>} : vector<48x64xf32>, vector<64x192xf32>, vector<48x192xf32> -> vector<48x192xf32>
    %77 = vector.extract_strided_slice %76 {offsets = [0, 0], sizes = [16, 64], strides = [1, 1]} : vector<48x192xf32> to vector<16x64xf32>
    %78 = arith.addf %73, %77 : vector<16x64xf32>
    %79 = vector.extract_strided_slice %76 {offsets = [16, 64], sizes = [16, 64], strides = [1, 1]} : vector<48x192xf32> to vector<16x64xf32>
    %80 = arith.addf %78, %79 : vector<16x64xf32>
    %81 = vector.extract_strided_slice %76 {offsets = [32, 128], sizes = [16, 64], strides = [1, 1]} : vector<48x192xf32> to vector<16x64xf32>
    %82 = arith.addf %80, %81 : vector<16x64xf32>
    %83 = vector.extract_strided_slice %63 {offsets = [96, 0], sizes = [48, 64], strides = [1, 1]} : vector<144x64xf32> to vector<48x64xf32>
    %c32_32 = arith.constant 32 : index
    %c384 = arith.constant 384 : index
    %84 = vector.load %arg4[%c32_32, %c384] : memref<96x1024xf32, #tpu.memory_space<vmem>>, vector<64x192xf32>
    %cst_33 = arith.constant dense<0.000000e+00> : vector<48x192xf32>
    %85 = tpu.matmul %83, %84, %cst_33 {dimension_numbers = #tpu.dot_dimension_numbers<[1], [0], [0], [1], [0, 0, 1, 1], [], []>} : vector<48x64xf32>, vector<64x192xf32>, vector<48x192xf32> -> vector<48x192xf32>
    %86 = vector.extract_strided_slice %85 {offsets = [0, 0], sizes = [16, 64], strides = [1, 1]} : vector<48x192xf32> to vector<16x64xf32>
    %87 = arith.addf %82, %86 : vector<16x64xf32>
    %88 = vector.extract_strided_slice %85 {offsets = [16, 64], sizes = [16, 64], strides = [1, 1]} : vector<48x192xf32> to vector<16x64xf32>
    %89 = arith.addf %87, %88 : vector<16x64xf32>
    %90 = vector.extract_strided_slice %85 {offsets = [32, 128], sizes = [16, 64], strides = [1, 1]} : vector<48x192xf32> to vector<16x64xf32>
    %91 = arith.addf %89, %90 : vector<16x64xf32>
    %92 = vector.broadcast %61 : vector<1x64xf32> to vector<16x64xf32>
    %93 = arith.addf %91, %92 : vector<16x64xf32>
    %cst_34 = arith.constant 0.000000e+00 : f32
    %94 = vector.broadcast %cst_34 : f32 to vector<16x64xf32>
    %95 = arith.maximumf %93, %94 : vector<16x64xf32>
    %96 = tpu.iota {dimensions = array<i32: 0>} : vector<16x1xi32>
    %c9_i32 = arith.constant 9 : i32
    %97 = vector.broadcast %c9_i32 : i32 to vector<16x1xi32>
    %98 = arith.cmpi slt, %96, %97 : vector<16x1xi32>
    %cst_35 = arith.constant 0.000000e+00 : f32
    %99 = vector.shape_cast %98 : vector<16x1xi1> to vector<16x1xi1>
    %100 = vector.broadcast %99 : vector<16x1xi1> to vector<16x64xi1>
    %101 = vector.broadcast %cst_35 : f32 to vector<16x64xf32>
    %102 = arith.select %100, %95, %101 : vector<16x64xi1>, vector<16x64xf32>
    %cst_36 = arith.constant dense<0.000000e+00> : vector<64xf32>
    %103 = vector.multi_reduction <add>, %102, %cst_36 [0] : vector<16x64xf32> to vector<64xf32>
    %104 = vector.shape_cast %103 : vector<64xf32> to vector<1x64xf32>
    %cst_37 = arith.constant 0.111111112 : f32
    %105 = vector.broadcast %cst_37 : f32 to vector<1x64xf32>
    %106 = arith.mulf %104, %105 : vector<1x64xf32>
    %c64 = arith.constant 64 : index
    %c0_38 = arith.constant 0 : index
    %107 = vector.load %arg5[%c64, %c0_38] : memref<656x256xf32, #tpu.memory_space<vmem>>, vector<64x128xf32>
    %cst_39 = arith.constant dense<0.000000e+00> : vector<1x128xf32>
    %108 = tpu.matmul %106, %107, %cst_39 {dimension_numbers = #tpu.dot_dimension_numbers<[1], [0], [0], [1], [0, 0, 1, 1], [], []>} : vector<1x64xf32>, vector<64x128xf32>, vector<1x128xf32> -> vector<1x128xf32>
    %c0_40 = arith.constant 0 : index
    %c384_41 = arith.constant 384 : index
    %109 = vector.load %arg6[%c0_40, %c384_41] : memref<1x1152xf32, #tpu.memory_space<vmem>>, vector<1x128xf32>
    %110 = arith.addf %108, %109 : vector<1x128xf32>
    %cst_42 = arith.constant 0.000000e+00 : f32
    %111 = vector.broadcast %cst_42 : f32 to vector<1x128xf32>
    %112 = arith.maximumf %110, %111 : vector<1x128xf32>
    %c0_43 = arith.constant 0 : index
    %c0_44 = arith.constant 0 : index
    %c0_45 = arith.constant 0 : index
    %113 = vector.load %arg2[%c0_43, %c0_44, %c0_45] : memref<1x1x16xf32, #tpu.memory_space<vmem>>, vector<1x1x16xf32>
    %114 = vector.shape_cast %113 : vector<1x1x16xf32> to vector<1x16xf32>
    %c128_46 = arith.constant 128 : index
    %c0_47 = arith.constant 0 : index
    %115 = vector.load %arg5[%c128_46, %c0_47] : memref<656x256xf32, #tpu.memory_space<vmem>>, vector<16x64xf32>
    %cst_48 = arith.constant dense<0.000000e+00> : vector<1x64xf32>
    %116 = tpu.matmul %114, %115, %cst_48 {dimension_numbers = #tpu.dot_dimension_numbers<[1], [0], [0], [1], [0, 0, 1, 1], [], []>} : vector<1x16xf32>, vector<16x64xf32>, vector<1x64xf32> -> vector<1x64xf32>
    %c0_49 = arith.constant 0 : index
    %c512_50 = arith.constant 512 : index
    %117 = vector.load %arg6[%c0_49, %c512_50] : memref<1x1152xf32, #tpu.memory_space<vmem>>, vector<1x64xf32>
    %118 = arith.addf %116, %117 : vector<1x64xf32>
    %cst_51 = arith.constant 0.000000e+00 : f32
    %119 = vector.broadcast %cst_51 : f32 to vector<1x64xf32>
    %120 = arith.maximumf %118, %119 : vector<1x64xf32>
    %c144 = arith.constant 144 : index
    %c0_52 = arith.constant 0 : index
    %121 = vector.load %arg5[%c144, %c0_52] : memref<656x256xf32, #tpu.memory_space<vmem>>, vector<64x64xf32>
    %cst_53 = arith.constant dense<0.000000e+00> : vector<1x64xf32>
    %122 = tpu.matmul %120, %121, %cst_53 {dimension_numbers = #tpu.dot_dimension_numbers<[1], [0], [0], [1], [0, 0, 1, 1], [], []>} : vector<1x64xf32>, vector<64x64xf32>, vector<1x64xf32> -> vector<1x64xf32>
    %c0_54 = arith.constant 0 : index
    %c640 = arith.constant 640 : index
    %123 = vector.load %arg6[%c0_54, %c640] : memref<1x1152xf32, #tpu.memory_space<vmem>>, vector<1x64xf32>
    %124 = arith.addf %122, %123 : vector<1x64xf32>
    %cst_55 = arith.constant 0.000000e+00 : f32
    %125 = vector.broadcast %cst_55 : f32 to vector<1x64xf32>
    %126 = arith.maximumf %124, %125 : vector<1x64xf32>
    %c208 = arith.constant 208 : index
    %c0_56 = arith.constant 0 : index
    %127 = vector.load %arg5[%c208, %c0_56] : memref<656x256xf32, #tpu.memory_space<vmem>>, vector<128x256xf32>
    %cst_57 = arith.constant dense<0.000000e+00> : vector<1x256xf32>
    %128 = tpu.matmul %112, %127, %cst_57 {dimension_numbers = #tpu.dot_dimension_numbers<[1], [0], [0], [1], [0, 0, 1, 1], [], []>} : vector<1x128xf32>, vector<128x256xf32>, vector<1x256xf32> -> vector<1x256xf32>
    %c336 = arith.constant 336 : index
    %c0_58 = arith.constant 0 : index
    %129 = vector.load %arg5[%c336, %c0_58] : memref<656x256xf32, #tpu.memory_space<vmem>>, vector<64x256xf32>
    %cst_59 = arith.constant dense<0.000000e+00> : vector<1x256xf32>
    %130 = tpu.matmul %126, %129, %cst_59 {dimension_numbers = #tpu.dot_dimension_numbers<[1], [0], [0], [1], [0, 0, 1, 1], [], []>} : vector<1x64xf32>, vector<64x256xf32>, vector<1x256xf32> -> vector<1x256xf32>
    %131 = arith.addf %128, %130 : vector<1x256xf32>
    %c0_60 = arith.constant 0 : index
    %c768_61 = arith.constant 768 : index
    %132 = vector.load %arg6[%c0_60, %c768_61] : memref<1x1152xf32, #tpu.memory_space<vmem>>, vector<1x256xf32>
    %133 = arith.addf %131, %132 : vector<1x256xf32>
    %cst_62 = arith.constant 0.000000e+00 : f32
    %134 = vector.broadcast %cst_62 : f32 to vector<1x256xf32>
    %135 = arith.maximumf %133, %134 : vector<1x256xf32>
    %c400 = arith.constant 400 : index
    %c0_63 = arith.constant 0 : index
    %136 = vector.load %arg5[%c400, %c0_63] : memref<656x256xf32, #tpu.memory_space<vmem>>, vector<256x2xf32>
    %cst_64 = arith.constant dense<0.000000e+00> : vector<1x2xf32>
    %137 = tpu.matmul %135, %136, %cst_64 {dimension_numbers = #tpu.dot_dimension_numbers<[1], [0], [0], [1], [0, 0, 1, 1], [], []>} : vector<1x256xf32>, vector<256x2xf32>, vector<1x2xf32> -> vector<1x2xf32>
    %c0_65 = arith.constant 0 : index
    %c1024 = arith.constant 1024 : index
    %138 = vector.load %arg6[%c0_65, %c1024] : memref<1x1152xf32, #tpu.memory_space<vmem>>, vector<1x2xf32>
    %139 = arith.addf %137, %138 : vector<1x2xf32>
    %140 = math.tanh %139 : vector<1x2xf32>
    %c0_66 = arith.constant 0 : index
    %c0_67 = arith.constant 0 : index
    %c0_68 = arith.constant 0 : index
    %141 = vector.load %arg7[%c0_66, %c0_67, %c0_68] : memref<1x1x2xf32, #tpu.memory_space<vmem>>, vector<1x1x2xf32>
    %142 = vector.shape_cast %141 : vector<1x1x2xf32> to vector<1x2xf32>
    %143 = vector.shape_cast %140 : vector<1x2xf32> to vector<1x1x2xf32>
    tpu.vector_store %arg7[%c0_66, %c0_67, %c0_68], %143 {strides = array<i32>} : memref<1x1x2xf32, #tpu.memory_space<vmem>>, vector<1x1x2xf32>,
    return
  }
  func.func @transform_0(%arg0: i32) -> (i32, i32, i32) {
    %c0_i32 = arith.constant 0 : i32
    %c0_i32_0 = arith.constant 0 : i32
    %c0_i32_1 = arith.constant 0 : i32
    return %arg0, %c0_i32, %c0_i32_0 : i32, i32, i32
  }
  func.func @transform_1(%arg0: i32) -> (i32, i32, i32) {
    %c0_i32 = arith.constant 0 : i32
    %c0_i32_0 = arith.constant 0 : i32
    %c0_i32_1 = arith.constant 0 : i32
    return %arg0, %c0_i32, %c0_i32_0 : i32, i32, i32
  }
  func.func @transform_2(%arg0: i32) -> (i32, i32) {
    %c0_i32 = arith.constant 0 : i32
    %c0_i32_0 = arith.constant 0 : i32
    %c0_i32_1 = arith.constant 0 : i32
    return %c0_i32, %c0_i32_0 : i32, i32
  }
  func.func @transform_3(%arg0: i32) -> (i32, i32) {
    %c0_i32 = arith.constant 0 : i32
    %c0_i32_0 = arith.constant 0 : i32
    %c0_i32_1 = arith.constant 0 : i32
    return %c0_i32, %c0_i32_0 : i32, i32
  }
  func.func @transform_4(%arg0: i32) -> (i32, i32) {
    %c0_i32 = arith.constant 0 : i32
    %c0_i32_0 = arith.constant 0 : i32
    %c0_i32_1 = arith.constant 0 : i32
    return %c0_i32, %c0_i32_0 : i32, i32
  }
  func.func @transform_5(%arg0: i32) -> (i32, i32) {
    %c0_i32 = arith.constant 0 : i32
    %c0_i32_0 = arith.constant 0 : i32
    %c0_i32_1 = arith.constant 0 : i32
    return %c0_i32, %c0_i32_0 : i32, i32
  }
  func.func @transform_6(%arg0: i32) -> (i32, i32, i32) {
    %c0_i32 = arith.constant 0 : i32
    %c0_i32_0 = arith.constant 0 : i32
    %c0_i32_1 = arith.constant 0 : i32
    return %arg0, %c0_i32, %c0_i32_0 : i32, i32, i32
  }
}

</mosaic_0001>

<llo_original>
// kernel: improved_actor_forward.1
$region0: #{improved_actor_forward.1}
  #allocation0 [shape = 'u32[]', space=smem, size = 0x4, offset = 0x4, fixed_abs, tag = 'smem constant byte address 0x4 - core index']
  #allocation1 [shape = 'u32[144,128]{1,0:T(1,128)}', space=vmem, size = 0x12000, scoped, tag = 'internal scratch']
  %s0 = inlined_call_operand.vmem [shape: f32[2,56,64], index: 0, kind: input, shape index: {}]
  %s1 = inlined_call_operand.vmem [shape: f32[2,1,16], index: 1, kind: input, shape index: {}]
  %s2 = inlined_call_operand.vmem [shape: f32[400,56], index: 2, kind: input, shape index: {}]
  %s3 = inlined_call_operand.vmem [shape: f32[96,1024], index: 3, kind: input, shape index: {}]
  %s4 = inlined_call_operand.vmem [shape: f32[656,256], index: 4, kind: input, shape index: {}]
  %s5 = inlined_call_operand.vmem [shape: f32[1,1152], index: 5, kind: input, shape index: {}]
  %s6 = inlined_call_operand.hbm [shape: f32[2,1,2], index: 6, kind: output, shape index: {}]
  %s7 = sld [smem:[#allocation0]]
  $region57: #{improved_actor_forward.1} parent=0
    _
  %s9 = ssub.s32 1, %s7
  %s10 = scalar_select 0, %s9, %s7
  $region1: #{improved_actor_forward.1} parent=0
    #allocation2 [shape = 'u8[1024]{0}', space=vmem, size = 0x400, scoped, tag = 'output window, operand 0']
    #allocation3 [shape = 's32[2]{0}', space=sflag, size = 0x8, scoped, tag = 'scoped memory for improved_actor_forward.1']
    %11 = vsyncpa [#allocation3], 0
    %s12 = scalar_lea.sflag [#allocation3], 1
    %13 = vsyncpa %s12, 0
    loop: start=0, step=1, limit=4
    $region2: #{improved_actor_forward.1} parent=1 // loop_pre_header
      _
    $region3: #{improved_actor_forward.1} parent=1 // loop_header
      %s15 = sphi 0, %s19
      %p16 = scmp.ge.s32.totalorder %s15, 4
      %s25 = sphi 0, %s27
      %s28 = sphi 0, %s25
      %s29 = sphi 0, %s28
      %s45 = sphi 0, %s29
      %s51 = sphi 0, %s53
      %s54 = sphi 0, %s51
      %s55 = sphi 0, %s54
      %s71 = sphi 0, %s55
      %s75 = sphi 0, %s75
      %s77 = sphi 0, %s75
      %s78 = sphi 0, %s77
      %s92 = sphi 0, %s78
      %s96 = sphi 0, %s96
      %s98 = sphi 0, %s96
      %s99 = sphi 0, %s98
      %s113 = sphi 0, %s99
      %s117 = sphi 0, %s117
      %s119 = sphi 0, %s117
      %s120 = sphi 0, %s119
      %s134 = sphi 0, %s120
      %s138 = sphi 0, %s138
      %s140 = sphi 0, %s138
      %s141 = sphi 0, %s140
      %s155 = sphi 0, %s141
      %s161 = sphi 0, %s163
      %s164 = sphi 0, %s161
      %s165 = sphi 0, %s164
      %s181 = sphi 0, %s165
    $region4: #{improved_actor_forward.1} parent=1 // loop_header_branch
      %18 = sbr.rel (%p16) target = $region8
    $region5: #{improved_actor_forward.1} parent=1 // loop_body
      %s20 = ssub.s32 %s15, 1
      %s21 = ssub.s32 %s15, 2
      %s22 = sadd.s32 %s15, 1
      %s23 = ssub.s32 %s15, %s22
      %p24 = scmp.eq.s32.totalorder %s23, 0
      %s26 = sadd.s32 %s25, 1
      %s27 = scalar_select %p24, %s25, %s26
      %p30 = pneg %p24
      %p31 = scmp.eq.s32.totalorder %s15, 1
      %p32 = por %p30, %p31
      %p33 = scmp.ne.s32.totalorder %s25, %s28
      %p34 = scmp.eq.s32.totalorder %s15, 0
      %p35 = por %p33, %p34
      %p36 = scmp.ne.s32.totalorder %s25, %s28
      %p37 = scmp.eq.s32.totalorder %s20, 1
      %p38 = por %p36, %p37
      %p39 = scmp.ne.s32.totalorder %s28, %s29
      %p40 = scmp.eq.s32.totalorder %s20, 0
      %p41 = por %p39, %p40
      %p42 = scmp.ne.s32.totalorder %s28, %s29
      %p43 = scmp.eq.s32.totalorder %s21, 1
      %p44 = por %p42, %p43
      %p46 = scmp.ne.s32.totalorder %s29, %s45
      %p47 = scmp.eq.s32.totalorder %s21, 0
      %p48 = por %p46, %p47
      %s49 = ssub.s32 %s15, %s22
      %p50 = scmp.eq.s32.totalorder %s49, 0
      %s52 = sadd.s32 %s51, 1
      %s53 = scalar_select %p50, %s51, %s52
      %p56 = pneg %p50
      %p57 = scmp.eq.s32.totalorder %s15, 1
      %p58 = por %p56, %p57
      %p59 = scmp.ne.s32.totalorder %s51, %s54
      %p60 = scmp.eq.s32.totalorder %s15, 0
      %p61 = por %p59, %p60
      %p62 = scmp.ne.s32.totalorder %s51, %s54
      %p63 = scmp.eq.s32.totalorder %s20, 1
      %p64 = por %p62, %p63
      %p65 = scmp.ne.s32.totalorder %s54, %s55
      %p66 = scmp.eq.s32.totalorder %s20, 0
      %p67 = por %p65, %p66
      %p68 = scmp.ne.s32.totalorder %s54, %s55
      %p69 = scmp.eq.s32.totalorder %s21, 1
      %p70 = por %p68, %p69
      %p72 = scmp.ne.s32.totalorder %s55, %s71
      %p73 = scmp.eq.s32.totalorder %s21, 0
      %p74 = por %p72, %p73
      %s76 = sadd.s32 %s75, 1
      %p79 = scmp.eq.s32.totalorder %s15, 1
      %p80 = scmp.ne.s32.totalorder %s75, %s77
      %p81 = scmp.eq.s32.totalorder %s15, 0
      %p82 = por %p80, %p81
      %p83 = scmp.ne.s32.totalorder %s75, %s77
      %p84 = scmp.eq.s32.totalorder %s20, 1
      %p85 = por %p83, %p84
      %p86 = scmp.ne.s32.totalorder %s77, %s78
      %p87 = scmp.eq.s32.totalorder %s20, 0
      %p88 = por %p86, %p87
      %p89 = scmp.ne.s32.totalorder %s77, %s78
      %p90 = scmp.eq.s32.totalorder %s21, 1
      %p91 = por %p89, %p90
      %p93 = scmp.ne.s32.totalorder %s78, %s92
      %p94 = scmp.eq.s32.totalorder %s21, 0
      %p95 = por %p93, %p94
      %s97 = sadd.s32 %s96, 1
      %p100 = scmp.eq.s32.totalorder %s15, 1
      %p101 = scmp.ne.s32.totalorder %s96, %s98
      %p102 = scmp.eq.s32.totalorder %s15, 0
      %p103 = por %p101, %p102
      %p104 = scmp.ne.s32.totalorder %s96, %s98
      %p105 = scmp.eq.s32.totalorder %s20, 1
      %p106 = por %p104, %p105
      %p107 = scmp.ne.s32.totalorder %s98, %s99
      %p108 = scmp.eq.s32.totalorder %s20, 0
      %p109 = por %p107, %p108
      %p110 = scmp.ne.s32.totalorder %s98, %s99
      %p111 = scmp.eq.s32.totalorder %s21, 1
      %p112 = por %p110, %p111
      %p114 = scmp.ne.s32.totalorder %s99, %s113
      %p115 = scmp.eq.s32.totalorder %s21, 0
      %p116 = por %p114, %p115
      %s118 = sadd.s32 %s117, 1
      %p121 = scmp.eq.s32.totalorder %s15, 1
      %p122 = scmp.ne.s32.totalorder %s117, %s119
      %p123 = scmp.eq.s32.totalorder %s15, 0
      %p124 = por %p122, %p123
      %p125 = scmp.ne.s32.totalorder %s117, %s119
      %p126 = scmp.eq.s32.totalorder %s20, 1
      %p127 = por %p125, %p126
      %p128 = scmp.ne.s32.totalorder %s119, %s120
      %p129 = scmp.eq.s32.totalorder %s20, 0
      %p130 = por %p128, %p129
      %p131 = scmp.ne.s32.totalorder %s119, %s120
      %p132 = scmp.eq.s32.totalorder %s21, 1
      %p133 = por %p131, %p132
      %p135 = scmp.ne.s32.totalorder %s120, %s134
      %p136 = scmp.eq.s32.totalorder %s21, 0
      %p137 = por %p135, %p136
      %s139 = sadd.s32 %s138, 1
      %p142 = scmp.eq.s32.totalorder %s15, 1
      %p143 = scmp.ne.s32.totalorder %s138, %s140
      %p144 = scmp.eq.s32.totalorder %s15, 0
      %p145 = por %p143, %p144
      %p146 = scmp.ne.s32.totalorder %s138, %s140
      %p147 = scmp.eq.s32.totalorder %s20, 1
      %p148 = por %p146, %p147
      %p149 = scmp.ne.s32.totalorder %s140, %s141
      %p150 = scmp.eq.s32.totalorder %s20, 0
      %p151 = por %p149, %p150
      %p152 = scmp.ne.s32.totalorder %s140, %s141
      %p153 = scmp.eq.s32.totalorder %s21, 1
      %p154 = por %p152, %p153
      %p156 = scmp.ne.s32.totalorder %s141, %s155
      %p157 = scmp.eq.s32.totalorder %s21, 0
      %p158 = por %p156, %p157
      %s159 = ssub.s32 %s15, %s22
      %p160 = scmp.eq.s32.totalorder %s159, 0
      %s162 = sadd.s32 %s161, 1
      %s163 = scalar_select %p160, %s161, %s162
      %p166 = pneg %p160
      %p167 = scmp.eq.s32.totalorder %s15, 1
      %p168 = por %p166, %p167
      %p169 = scmp.ne.s32.totalorder %s161, %s164
      %p170 = scmp.eq.s32.totalorder %s15, 0
      %p171 = por %p169, %p170
      %p172 = scmp.ne.s32.totalorder %s161, %s164
      %p173 = scmp.eq.s32.totalorder %s20, 1
      %p174 = por %p172, %p173
      %p175 = scmp.ne.s32.totalorder %s164, %s165
      %p176 = scmp.eq.s32.totalorder %s20, 0
      %p177 = por %p175, %p176
      %p178 = scmp.ne.s32.totalorder %s164, %s165
      %p179 = scmp.eq.s32.totalorder %s21, 1
      %p180 = por %p178, %p179
      %p182 = scmp.ne.s32.totalorder %s165, %s181
      %p183 = scmp.eq.s32.totalorder %s21, 0
      %p184 = por %p182, %p183
      %p185 = scmp.le.s32.totalorder 1, %s15
      %p186 = scmp.lt.s32.totalorder %s15, 3
      %p187 = pnand %p185, %p186
      %p188 = pneg %p187
      // Predicated region
      $region9: #{improved_actor_forward.1} parent=5 // pred_check
        _
      $region10: #{improved_actor_forward.1} parent=5 // pred_check_branch
        %190 = sbr.rel (%p187) target = $region12
      $region11: #{improved_actor_forward.1} parent=5 // pred_region
        %s191 = ssub.s32 %s15, 1
        // Predicated region
        $region13: #{improved_actor_forward.1} parent=11 // pred_check
          %p192 = pneg %p88
        $region14: #{improved_actor_forward.1} parent=11 // pred_check_branch
          %194 = sbr.rel (%p192) target = $region16
        $region15: #{improved_actor_forward.1} parent=11 // pred_region
          _
        $region16: #{improved_actor_forward.1} parent=11 // pred_fallthru
          _
        // Predicated region
        $region17: #{improved_actor_forward.1} parent=11 // pred_check
          %p195 = pneg %p109
        $region18: #{improved_actor_forward.1} parent=11 // pred_check_branch
          %197 = sbr.rel (%p195) target = $region20
        $region19: #{improved_actor_forward.1} parent=11 // pred_region
          _
        $region20: #{improved_actor_forward.1} parent=11 // pred_fallthru
          _
        // Predicated region
        $region21: #{improved_actor_forward.1} parent=11 // pred_check
          %p198 = pneg %p130
        $region22: #{improved_actor_forward.1} parent=11 // pred_check_branch
          %200 = sbr.rel (%p198) target = $region24
        $region23: #{improved_actor_forward.1} parent=11 // pred_region
          _
        $region24: #{improved_actor_forward.1} parent=11 // pred_fallthru
          _
        // Predicated region
        $region25: #{improved_actor_forward.1} parent=11 // pred_check
          %p201 = pneg %p151
        $region26: #{improved_actor_forward.1} parent=11 // pred_check_branch
          %203 = sbr.rel (%p201) target = $region28
        $region27: #{improved_actor_forward.1} parent=11 // pred_region
          _
        $region28: #{improved_actor_forward.1} parent=11 // pred_fallthru
          _
      $region12: #{improved_actor_forward.1} parent=5 // pred_fallthru
        _
      %p204 = scmp.lt.s32.totalorder %s15, 2
      // Predicated region
      $region29: #{improved_actor_forward.1} parent=5 // pred_check
        %p205 = pneg %p204
      $region30: #{improved_actor_forward.1} parent=5 // pred_check_branch
        %207 = sbr.rel (%p205) target = $region32
      $region31: #{improved_actor_forward.1} parent=5 // pred_region
        // Predicated region
        $region33: #{improved_actor_forward.1} parent=31 // pred_check
          %p208 = pneg %p35
        $region34: #{improved_actor_forward.1} parent=31 // pred_check_branch
          %210 = sbr.rel (%p208) target = $region36
        $region35: #{improved_actor_forward.1} parent=31 // pred_region
          %p211 = scmp.lt.s32.totalorder %s15, 1
          %s212 = scalar_select %p211, %s15, 1
          %s213 = smul.addr %s212, 7
          %s214 = smul.addr %s213, 8
          %s215 = scalar_lea.vmem %s0, %s214
        $region36: #{improved_actor_forward.1} parent=31 // pred_fallthru
          _
        // Predicated region
        $region37: #{improved_actor_forward.1} parent=31 // pred_check
          %p216 = pneg %p61
        $region38: #{improved_actor_forward.1} parent=31 // pred_check_branch
          %218 = sbr.rel (%p216) target = $region40
        $region39: #{improved_actor_forward.1} parent=31 // pred_region
          %p219 = scmp.lt.s32.totalorder %s15, 1
          %s220 = scalar_select %p219, %s15, 1
          %s221 = scalar_lea.vmem %s1, %s220
        $region40: #{improved_actor_forward.1} parent=31 // pred_fallthru
          _
      $region32: #{improved_actor_forward.1} parent=5 // pred_fallthru
        _
      %p222 = scmp.le.s32.totalorder 1, %s15
      %p223 = scmp.lt.s32.totalorder %s15, 3
      %p224 = pnand %p222, %p223
      %p225 = pneg %p224
      // Predicated region
      $region41: #{improved_actor_forward.1} parent=5 // pred_check
        _
      $region42: #{improved_actor_forward.1} parent=5 // pred_check_branch
        %227 = sbr.rel (%p224) target = $region44
      $region43: #{improved_actor_forward.1} parent=5 // pred_region
        %s228 = ssub.s32 %s15, 1
        %p229 = scmp.lt.s32.totalorder %s20, 1
        %s230 = scalar_select %p229, %s20, 1
        %s231 = smul.addr %s230, 7
        %s232 = smul.addr %s231, 8
        %s233 = scalar_lea.vmem %s0, %s232
        %p234 = pneg %p41
        %p235 = pneg %p38
        %p236 = scmp.lt.s32.totalorder %s20, 1
        %s237 = scalar_select %p236, %s20, 1
        %s238 = scalar_lea.vmem %s1, %s237
        %p239 = pneg %p67
        %p240 = pneg %p64
        %p241 = pneg %p88
        %p242 = pneg %p85
        %p243 = pneg %p109
        %p244 = pneg %p106
        %p245 = pneg %p130
        %p246 = pneg %p127
        %p247 = pneg %p151
        %p248 = pneg %p148
        %p249 = pneg %p177
        %p250 = pneg %p174
        %s251 = sand.u32 %s164, 1
        %s252 = scalar_lea.sflag [#allocation3], %s251
        %s253 = sand.u32 %s164, 1
        %s254 = scalar_lea.vmem [#allocation2], %s253
        %p255 = scmp.lt.s32.totalorder %s20, 1
        %s256 = scalar_select %p255, %s20, 1
        %s257 = smul.addr %s256, 7
        %s258 = smul.addr %s257, 8
        %s259 = scalar_lea.vmem %s0, %s258
        %p260 = scmp.lt.s32.totalorder %s20, 1
        %s261 = scalar_select %p260, %s20, 1
        %s262 = scalar_lea.vmem %s1, %s261
        %v263 = vld [vmem:[%s259] sm:$0xff]
        %v264 = vld [vmem:[%s259 + $0x8] sm:$0xff]
        %v265 = vld [vmem:[%s259 + $0x10] sm:$0xff]
        %v266 = vld [vmem:[%s259 + $0x18] sm:$0xff]
        %v267 = vld [vmem:[%s259 + $0x20] sm:$0xff]
        %v268 = vld [vmem:[%s259 + $0x28] sm:$0xff]
        %v269 = vld [vmem:[%s259 + $0x30] sm:$0xff]
        %v270 = vld [vmem:[%s4] sm:$0xff]
        %v271 = vld [vmem:[%s4 + $0x10] sm:$0xff]
        %v272 = vld [vmem:[%s4 + $0x20] sm:$0xff]
        %v273 = vld [vmem:[%s4 + $0x30] sm:$0xff]
        %v274 = vld [vmem:[%s4 + $0x40] sm:$0xff]
        %v275 = vld [vmem:[%s4 + $0x50] sm:$0xff]
        %v276 = vld [vmem:[%s4 + $0x60] sm:$0xff]
        %v277 = vld [vmem:[%s4 + $0x70] sm:$0xff]
        %v278 = vld [vmem:[%s5] sm:$0x1]
        %v280 = vlaneseq
        %v281 = vshrl.u32 %v280, 7
        %v282 = vsub.s32 0, %v281
        %v283 = vrot.slane %v278, %v282
        %vm285 = vcmask 523264
        %v287 = vsel %vm285, %v263, 0
        %v290 = vsel %vm285, %v264, 0
        %v293 = vsel %vm285, %v265, 0
        %v296 = vsel %vm285, %v266, 0
        %v299 = vsel %vm285, %v267, 0
        %v302 = vsel %vm285, %v268, 0
        %v305 = vsel %vm285, %v269, 0
        %307 = vmatprep.subr.mxu0 0.0
        %308 = vmatpush1.msra.mxu0 %v270
        %309 = vmatprep.subr.mxu0 0.0
        %310 = vmatpush1.msra.mxu0 %v271
        %311 = vmatprep.subr.mxu0 0.0
        %312 = vmatpush1.msra.mxu0 %v272
        %313 = vmatprep.subr.mxu0 0.0
        %314 = vmatpush1.msra.mxu0 %v273
        %315 = vmatprep.subr.mxu0 0.0
        %316 = vmatpush1.msra.mxu0 %v274
        %317 = vmatprep.subr.mxu0 0.0
        %318 = vmatpush1.msra.mxu0 %v275
        %319 = vmatprep.subr.mxu0 0.0
        %320 = vmatpush1.msra.mxu0 %v276
        %321 = vmatprep.subr.mxu0 0.0
        %322 = vmatpush1.msra.mxu0 %v277
        %323 = vmatprep.subr.mxu0 0.0
        %324 = vmatpush1.msra.mxu0 0.0
        %325 = vmatprep.subr.mxu0 0.0
        %326 = vmatpush1.msra.mxu0 0.0
        %327 = vmatprep.subr.mxu0 0.0
        %328 = vmatpush1.msra.mxu0 0.0
        %329 = vmatprep.subr.mxu0 0.0
        %330 = vmatpush1.msra.mxu0 0.0
        %331 = vmatprep.subr.mxu0 0.0
        %332 = vmatpush1.msra.mxu0 0.0
        %333 = vmatprep.subr.mxu0 0.0
        %334 = vmatpush1.msra.mxu0 0.0
        %335 = vmatprep.subr.mxu0 0.0
        %336 = vmatpush1.msra.mxu0 0.0
        %337 = vmatprep.subr.mxu0 0.0
        %338 = vmatpush1.msra.mxu0 0.0
        %339 = vmatprep.subr.mxu0 0.0
        %340 = vmatpush1.msra.mxu0 0.0
        %341 = vmatprep.subr.mxu0 0.0
        %342 = vmatpush1.msra.mxu0 0.0
        %343 = vmatprep.subr.mxu0 0.0
        %344 = vmatpush1.msra.mxu0 0.0
        %345 = vmatprep.subr.mxu0 0.0
        %346 = vmatpush1.msra.mxu0 0.0
        %347 = vmatprep.subr.mxu0 0.0
        %348 = vmatpush1.msra.mxu0 0.0
        %349 = vmatprep.subr.mxu0 0.0
        %350 = vmatpush1.msra.mxu0 0.0
        %351 = vmatprep.subr.mxu0 0.0
        %352 = vmatpush1.msra.mxu0 0.0
        %353 = vmatprep.subr.mxu0 0.0
        %354 = vmatpush1.msra.mxu0 0.0
        %355 = vmatprep.subr.mxu0 0.0
        %356 = vmatpush1.msra.mxu0 0.0
        %357 = vmatprep.subr.mxu0 0.0
        %358 = vmatpush1.msra.mxu0 0.0
        %359 = vmatprep.subr.mxu0 0.0
        %360 = vmatpush1.msra.mxu0 0.0
        %361 = vmatprep.subr.mxu0 0.0
        %362 = vmatpush1.msra.mxu0 0.0
        %363 = vmatprep.subr.mxu0 0.0
        %364 = vmatpush1.msra.mxu0 0.0
        %365 = vmatprep.subr.mxu0 0.0
        %366 = vmatpush1.msra.mxu0 0.0
        %367 = vmatprep.subr.mxu0 0.0
        %368 = vmatpush1.msra.mxu0 0.0
        %369 = vmatprep.subr.mxu0 0.0
        %370 = vmatpush1.msra.mxu0 0.0
        %371 = vmatprep.mubr.f32.mxu0 0.0
        %372 = vmatmul.mubr.f32.gmra.mrb[0].mxu0 %v287
        %v373 = vpop.f32.mrb[0].mxu0
        %v374 = vadd.f32 %v283, %v373
        %v375 = vpop.f32.mrb[0].mxu0
        %376 = vmatprep.mubr.f32.mxu0 0.0
        %377 = vmatmul.mubr.f32.gmra.mrb[0].mxu0 %v290
        %v378 = vpop.f32.mrb[0].mxu0
        %v379 = vadd.f32 %v283, %v378
        %v380 = vpop.f32.mrb[0].mxu0
        %381 = vmatprep.mubr.f32.mxu0 0.0
        %382 = vmatmul.mubr.f32.gmra.mrb[0].mxu0 %v293
        %v383 = vpop.f32.mrb[0].mxu0
        %v384 = vadd.f32 %v283, %v383
        %v385 = vpop.f32.mrb[0].mxu0
        %386 = vmatprep.mubr.f32.mxu0 0.0
        %387 = vmatmul.mubr.f32.gmra.mrb[0].mxu0 %v296
        %v388 = vpop.f32.mrb[0].mxu0
        %v389 = vadd.f32 %v283, %v388
        %v390 = vpop.f32.mrb[0].mxu0
        %391 = vmatprep.mubr.f32.mxu0 0.0
        %392 = vmatmul.mubr.f32.gmra.mrb[0].mxu0 %v299
        %v393 = vpop.f32.mrb[0].mxu0
        %v394 = vadd.f32 %v283, %v393
        %v395 = vpop.f32.mrb[0].mxu0
        %396 = vmatprep.mubr.f32.mxu0 0.0
        %397 = vmatmul.mubr.f32.gmra.mrb[0].mxu0 %v302
        %v398 = vpop.f32.mrb[0].mxu0
        %v399 = vadd.f32 %v283, %v398
        %v400 = vpop.f32.mrb[0].mxu0
        %401 = vmatprep.mubr.f32.mxu0 0.0
        %402 = vmatmul.mubr.f32.gmra.mrb[0].mxu0 %v305
        %v403 = vpop.f32.mrb[0].mxu0
        %v404 = vadd.f32 %v283, %v403
        %v405 = vpop.f32.mrb[0].mxu0
        %406 = vdwg.mxu0
        %v407 = vmax.f32 %v374, 0.0
        %v408 = vmax.f32 %v379, 0.0
        %v409 = vmax.f32 %v384, 0.0
        %v410 = vmax.f32 %v389, 0.0
        %v411 = vmax.f32 %v394, 0.0
        %v412 = vmax.f32 %v399, 0.0
        %v413 = vmax.f32 %v404, 0.0
        %v414 = vld [vmem:[%s5 + $0x1] sm:$0x1]
        %v415 = vld [vmem:[%s2] sm:$0xff]
        %v416 = vld [vmem:[%s2 + $0x8] sm:$0xff]
        %v417 = vld [vmem:[%s2 + $0x10] sm:$0xff]
        %v418 = vld [vmem:[%s2 + $0x18] sm:$0xff]
        %v419 = vld [vmem:[%s2 + $0x20] sm:$0xff]
        %v420 = vld [vmem:[%s2 + $0x28] sm:$0xff]
        %v421 = vld [vmem:[%s2 + $0x30] sm:$0xff]
        %v422 = vld [vmem:[%s2 + $0x38] sm:$0xff]
        %v423 = vld [vmem:[%s2 + $0x40] sm:$0xff]
        %v424 = vld [vmem:[%s2 + $0x48] sm:$0xff]
        %v425 = vld [vmem:[%s2 + $0x50] sm:$0xff]
        %v426 = vld [vmem:[%s2 + $0x58] sm:$0xff]
        %v427 = vld [vmem:[%s2 + $0x60] sm:$0xff]
        %v428 = vld [vmem:[%s2 + $0x68] sm:$0xff]
        %v429 = vld [vmem:[%s2 + $0x70] sm:$0xff]
        %v430 = vld [vmem:[%s2 + $0x78] sm:$0xff]
        %v431 = vld [vmem:[%s2 + $0x80] sm:$0xff]
        %v432 = vld [vmem:[%s2 + $0x88] sm:$0xff]
        %v433 = vld [vmem:[%s2 + $0x90] sm:$0xff]
        %v434 = vld [vmem:[%s2 + $0x98] sm:$0xff]
        %v435 = vld [vmem:[%s2 + $0xa0] sm:$0xff]
        %v436 = vld [vmem:[%s2 + $0xa8] sm:$0xff]
        %v437 = vld [vmem:[%s2 + $0xb0] sm:$0xff]
        %v438 = vld [vmem:[%s2 + $0xb8] sm:$0xff]
        %v439 = vld [vmem:[%s2 + $0xc0] sm:$0xff]
        %v440 = vld [vmem:[%s2 + $0xc8] sm:$0xff]
        %v441 = vld [vmem:[%s2 + $0xd0] sm:$0xff]
        %v442 = vld [vmem:[%s2 + $0xd8] sm:$0xff]
        %v443 = vld [vmem:[%s2 + $0xe0] sm:$0xff]
        %v444 = vld [vmem:[%s2 + $0xe8] sm:$0xff]
        %v445 = vld [vmem:[%s2 + $0xf0] sm:$0xff]
        %v446 = vld [vmem:[%s2 + $0xf8] sm:$0xff]
        %vm447 = vcmask 457728
        %v449 = vsel %vm447, %v415, 0
        %v452 = vsel %vm447, %v416, 0
        %v455 = vsel %vm447, %v417, 0
        %v458 = vsel %vm447, %v418, 0
        %v461 = vsel %vm447, %v419, 0
        %v464 = vsel %vm447, %v420, 0
        %v467 = vsel %vm447, %v421, 0
        %v470 = vsel %vm447, %v422, 0
        %v473 = vsel %vm447, %v423, 0
        %v476 = vsel %vm447, %v424, 0
        %v479 = vsel %vm447, %v425, 0
        %v482 = vsel %vm447, %v426, 0
        %v485 = vsel %vm447, %v427, 0
        %v488 = vsel %vm447, %v428, 0
        %v491 = vsel %vm447, %v429, 0
        %v494 = vsel %vm447, %v430, 0
        %v497 = vsel %vm447, %v431, 0
        %v500 = vsel %vm447, %v432, 0
        %v503 = vsel %vm447, %v433, 0
        %v506 = vsel %vm447, %v434, 0
        %v509 = vsel %vm447, %v435, 0
        %v512 = vsel %vm447, %v436, 0
        %v515 = vsel %vm447, %v437, 0
        %v518 = vsel %vm447, %v438, 0
        %v521 = vsel %vm447, %v439, 0
        %v524 = vsel %vm447, %v440, 0
        %v527 = vsel %vm447, %v441, 0
        %v530 = vsel %vm447, %v442, 0
        %v533 = vsel %vm447, %v443, 0
        %v536 = vsel %vm447, %v444, 0
        %v539 = vsel %vm447, %v445, 0
        %v542 = vsel %vm447, %v446, 0
        %544 = vmatprep.subr.mxu0 0.0
        %545 = vmatpush1.msra.mxu0 %v407
        %546 = vmatprep.subr.mxu0 0.0
        %547 = vmatpush1.msra.mxu0 %v408
        %548 = vmatprep.subr.mxu0 0.0
        %549 = vmatpush1.msra.mxu0 %v409
        %550 = vmatprep.subr.mxu0 0.0
        %551 = vmatpush1.msra.mxu0 %v410
        %552 = vmatprep.subr.mxu0 0.0
        %553 = vmatpush1.msra.mxu0 %v411
        %554 = vmatprep.subr.mxu0 0.0
        %555 = vmatpush1.msra.mxu0 %v412
        %556 = vmatprep.subr.mxu0 0.0
        %557 = vmatpush1.msra.mxu0 %v413
        %558 = vmatprep.subr.mxu0 0.0
        %559 = vmatpush1.msra.mxu0 0.0
        %560 = vmatprep.subr.mxu0 0.0
        %561 = vmatpush1.msra.mxu0 0.0
        %562 = vmatprep.subr.mxu0 0.0
        %563 = vmatpush1.msra.mxu0 0.0
        %564 = vmatprep.subr.mxu0 0.0
        %565 = vmatpush1.msra.mxu0 0.0
        %566 = vmatprep.subr.mxu0 0.0
        %567 = vmatpush1.msra.mxu0 0.0
        %568 = vmatprep.subr.mxu0 0.0
        %569 = vmatpush1.msra.mxu0 0.0
        %570 = vmatprep.subr.mxu0 0.0
        %571 = vmatpush1.msra.mxu0 0.0
        %572 = vmatprep.subr.mxu0 0.0
        %573 = vmatpush1.msra.mxu0 0.0
        %574 = vmatprep.subr.mxu0 0.0
        %575 = vmatpush1.msra.mxu0 0.0
        %576 = vmatprep.subr.mxu0 0.0
        %577 = vmatpush1.msra.mxu0 0.0
        %578 = vmatprep.subr.mxu0 0.0
        %579 = vmatpush1.msra.mxu0 0.0
        %580 = vmatprep.subr.mxu0 0.0
        %581 = vmatpush1.msra.mxu0 0.0
        %582 = vmatprep.subr.mxu0 0.0
        %583 = vmatpush1.msra.mxu0 0.0
        %584 = vmatprep.subr.mxu0 0.0
        %585 = vmatpush1.msra.mxu0 0.0
        %586 = vmatprep.subr.mxu0 0.0
        %587 = vmatpush1.msra.mxu0 0.0
        %588 = vmatprep.subr.mxu0 0.0
        %589 = vmatpush1.msra.mxu0 0.0
        %590 = vmatprep.subr.mxu0 0.0
        %591 = vmatpush1.msra.mxu0 0.0
        %592 = vmatprep.subr.mxu0 0.0
        %593 = vmatpush1.msra.mxu0 0.0
        %594 = vmatprep.subr.mxu0 0.0
        %595 = vmatpush1.msra.mxu0 0.0
        %596 = vmatprep.subr.mxu0 0.0
        %597 = vmatpush1.msra.mxu0 0.0
        %598 = vmatprep.subr.mxu0 0.0
        %599 = vmatpush1.msra.mxu0 0.0
        %600 = vmatprep.subr.mxu0 0.0
        %601 = vmatpush1.msra.mxu0 0.0
        %602 = vmatprep.subr.mxu0 0.0
        %603 = vmatpush1.msra.mxu0 0.0
        %604 = vmatprep.subr.mxu0 0.0
        %605 = vmatpush1.msra.mxu0 0.0
        %606 = vmatprep.subr.mxu0 0.0
        %607 = vmatpush1.msra.mxu0 0.0
        %608 = vmatprep.mubr.f32.mxu0 0.0
        %609 = vmatmul.mubr.f32.gmra.mrb[0].mxu0 %v449
        %v610 = vpop.f32.mrb[0].mxu0
        %v611 = vadd.f32 0.0, %v610
        %v612 = vpop.f32.mrb[0].mxu0
        %613 = vmatprep.mubr.f32.mxu0 0.0
        %614 = vmatmul.mubr.f32.gmra.mrb[0].mxu0 %v452
        %v615 = vpop.f32.mrb[0].mxu0
        %v616 = vadd.f32 0.0, %v615
        %v617 = vpop.f32.mrb[0].mxu0
        %618 = vmatprep.mubr.f32.mxu0 0.0
        %619 = vmatmul.mubr.f32.gmra.mrb[0].mxu0 %v455
        %v620 = vpop.f32.mrb[0].mxu0
        %v621 = vadd.f32 0.0, %v620
        %v622 = vpop.f32.mrb[0].mxu0
        %623 = vmatprep.mubr.f32.mxu0 0.0
        %624 = vmatmul.mubr.f32.gmra.mrb[0].mxu0 %v458
        %v625 = vpop.f32.mrb[0].mxu0
        %v626 = vadd.f32 0.0, %v625
        %v627 = vpop.f32.mrb[0].mxu0
        %628 = vmatprep.mubr.f32.mxu0 0.0
        %629 = vmatmul.mubr.f32.gmra.mrb[0].mxu0 %v461
        %v630 = vpop.f32.mrb[0].mxu0
        %v631 = vadd.f32 0.0, %v630
        %v632 = vpop.f32.mrb[0].mxu0
        %633 = vmatprep.mubr.f32.mxu0 0.0
        %634 = vmatmul.mubr.f32.gmra.mrb[0].mxu0 %v464
        %v635 = vpop.f32.mrb[0].mxu0
        %v636 = vadd.f32 0.0, %v635
        %v637 = vpop.f32.mrb[0].mxu0
        %638 = vmatprep.mubr.f32.mxu0 0.0
        %639 = vmatmul.mubr.f32.gmra.mrb[0].mxu0 %v467
        %v640 = vpop.f32.mrb[0].mxu0
        %v641 = vadd.f32 0.0, %v640
        %v642 = vpop.f32.mrb[0].mxu0
        %643 = vmatprep.mubr.f32.mxu0 0.0
        %644 = vmatmul.mubr.f32.gmra.mrb[0].mxu0 %v470
        %v645 = vpop.f32.mrb[0].mxu0
        %v646 = vadd.f32 0.0, %v645
        %v647 = vpop.f32.mrb[0].mxu0
        %648 = vmatprep.mubr.f32.mxu0 0.0
        %649 = vmatmul.mubr.f32.gmra.mrb[0].mxu0 %v473
        %v650 = vpop.f32.mrb[0].mxu0
        %v651 = vadd.f32 0.0, %v650
        %v652 = vpop.f32.mrb[0].mxu0
        %653 = vmatprep.mubr.f32.mxu0 0.0
        %654 = vmatmul.mubr.f32.gmra.mrb[0].mxu0 %v476
        %v655 = vpop.f32.mrb[0].mxu0
        %v656 = vadd.f32 0.0, %v655
        %v657 = vpop.f32.mrb[0].mxu0
        %658 = vmatprep.mubr.f32.mxu0 0.0
        %659 = vmatmul.mubr.f32.gmra.mrb[0].mxu0 %v479
        %v660 = vpop.f32.mrb[0].mxu0
        %v661 = vadd.f32 0.0, %v660
        %v662 = vpop.f32.mrb[0].mxu0
        %663 = vmatprep.mubr.f32.mxu0 0.0
        %664 = vmatmul.mubr.f32.gmra.mrb[0].mxu0 %v482
        %v665 = vpop.f32.mrb[0].mxu0
        %v666 = vadd.f32 0.0, %v665
        %v667 = vpop.f32.mrb[0].mxu0
        %668 = vmatprep.mubr.f32.mxu0 0.0
        %669 = vmatmul.mubr.f32.gmra.mrb[0].mxu0 %v485
        %v670 = vpop.f32.mrb[0].mxu0
        %v671 = vadd.f32 0.0, %v670
        %v672 = vpop.f32.mrb[0].mxu0
        %673 = vmatprep.mubr.f32.mxu0 0.0
        %674 = vmatmul.mubr.f32.gmra.mrb[0].mxu0 %v488
        %v675 = vpop.f32.mrb[0].mxu0
        %v676 = vadd.f32 0.0, %v675
        %v677 = vpop.f32.mrb[0].mxu0
        %678 = vmatprep.mubr.f32.mxu0 0.0
        %679 = vmatmul.mubr.f32.gmra.mrb[0].mxu0 %v491
        %v680 = vpop.f32.mrb[0].mxu0
        %v681 = vadd.f32 0.0, %v680
        %v682 = vpop.f32.mrb[0].mxu0
        %683 = vmatprep.mubr.f32.mxu0 0.0
        %684 = vmatmul.mubr.f32.gmra.mrb[0].mxu0 %v494
        %v685 = vpop.f32.mrb[0].mxu0
        %v686 = vadd.f32 0.0, %v685
        %v687 = vpop.f32.mrb[0].mxu0
        %688 = vmatprep.mubr.f32.mxu0 0.0
        %689 = vmatmul.mubr.f32.gmra.mrb[0].mxu0 %v497
        %v690 = vpop.f32.mrb[0].mxu0
        %v691 = vadd.f32 0.0, %v690
        %v692 = vpop.f32.mrb[0].mxu0
        %693 = vmatprep.mubr.f32.mxu0 0.0
        %694 = vmatmul.mubr.f32.gmra.mrb[0].mxu0 %v500
        %v695 = vpop.f32.mrb[0].mxu0
        %v696 = vadd.f32 0.0, %v695
        %v697 = vpop.f32.mrb[0].mxu0
        %698 = vmatprep.mubr.f32.mxu0 0.0
        %699 = vmatmul.mubr.f32.gmra.mrb[0].mxu0 %v503
        %v700 = vpop.f32.mrb[0].mxu0
        %v701 = vadd.f32 0.0, %v700
        %v702 = vpop.f32.mrb[0].mxu0
        %703 = vmatprep.mubr.f32.mxu0 0.0
        %704 = vmatmul.mubr.f32.gmra.mrb[0].mxu0 %v506
        %v705 = vpop.f32.mrb[0].mxu0
        %v706 = vadd.f32 0.0, %v705
        %v707 = vpop.f32.mrb[0].mxu0
        %708 = vmatprep.mubr.f32.mxu0 0.0
        %709 = vmatmul.mubr.f32.gmra.mrb[0].mxu0 %v509
        %v710 = vpop.f32.mrb[0].mxu0
        %v711 = vadd.f32 0.0, %v710
        %v712 = vpop.f32.mrb[0].mxu0
        %713 = vmatprep.mubr.f32.mxu0 0.0
        %714 = vmatmul.mubr.f32.gmra.mrb[0].mxu0 %v512
        %v715 = vpop.f32.mrb[0].mxu0
        %v716 = vadd.f32 0.0, %v715
        %v717 = vpop.f32.mrb[0].mxu0
        %718 = vmatprep.mubr.f32.mxu0 0.0
        %719 = vmatmul.mubr.f32.gmra.mrb[0].mxu0 %v515
        %v720 = vpop.f32.mrb[0].mxu0
        %v721 = vadd.f32 0.0, %v720
        %v722 = vpop.f32.mrb[0].mxu0
        %723 = vmatprep.mubr.f32.mxu0 0.0
        %724 = vmatmul.mubr.f32.gmra.mrb[0].mxu0 %v518
        %v725 = vpop.f32.mrb[0].mxu0
        %v726 = vadd.f32 0.0, %v725
        %v727 = vpop.f32.mrb[0].mxu0
        %728 = vmatprep.mubr.f32.mxu0 0.0
        %729 = vmatmul.mubr.f32.gmra.mrb[0].mxu0 %v521
        %v730 = vpop.f32.mrb[0].mxu0
        %v731 = vadd.f32 0.0, %v730
        %v732 = vpop.f32.mrb[0].mxu0
        %733 = vmatprep.mubr.f32.mxu0 0.0
        %734 = vmatmul.mubr.f32.gmra.mrb[0].mxu0 %v524
        %v735 = vpop.f32.mrb[0].mxu0
        %v736 = vadd.f32 0.0, %v735
        %v737 = vpop.f32.mrb[0].mxu0
        %738 = vmatprep.mubr.f32.mxu0 0.0
        %739 = vmatmul.mubr.f32.gmra.mrb[0].mxu0 %v527
        %v740 = vpop.f32.mrb[0].mxu0
        %v741 = vadd.f32 0.0, %v740
        %v742 = vpop.f32.mrb[0].mxu0
        %743 = vmatprep.mubr.f32.mxu0 0.0
        %744 = vmatmul.mubr.f32.gmra.mrb[0].mxu0 %v530
        %v745 = vpop.f32.mrb[0].mxu0
        %v746 = vadd.f32 0.0, %v745
        %v747 = vpop.f32.mrb[0].mxu0
        %748 = vmatprep.mubr.f32.mxu0 0.0
        %749 = vmatmul.mubr.f32.gmra.mrb[0].mxu0 %v533
        %v750 = vpop.f32.mrb[0].mxu0
        %v751 = vadd.f32 0.0, %v750
        %v752 = vpop.f32.mrb[0].mxu0
        %753 = vmatprep.mubr.f32.mxu0 0.0
        %754 = vmatmul.mubr.f32.gmra.mrb[0].mxu0 %v536
        %v755 = vpop.f32.mrb[0].mxu0
        %v756 = vadd.f32 0.0, %v755
        %v757 = vpop.f32.mrb[0].mxu0
        %758 = vmatprep.mubr.f32.mxu0 0.0
        %759 = vmatmul.mubr.f32.gmra.mrb[0].mxu0 %v539
        %v760 = vpop.f32.mrb[0].mxu0
        %v761 = vadd.f32 0.0, %v760
        %v762 = vpop.f32.mrb[0].mxu0
        %763 = vmatprep.mubr.f32.mxu0 0.0
        %764 = vmatmul.mubr.f32.gmra.mrb[0].mxu0 %v542
        %v765 = vpop.f32.mrb[0].mxu0
        %v766 = vadd.f32 0.0, %v765
        %v767 = vpop.f32.mrb[0].mxu0
        %768 = vdwg.mxu0
        %v769 = vld [vmem:[%s3] sm:$0xff]
        %v770 = vld [vmem:[%s3 + $0x8] sm:$0xff]
        %v771 = vld [vmem:[%s3 + $0x40] sm:$0xff]
        %v772 = vld [vmem:[%s3 + $0x48] sm:$0xff]
        %v773 = vld [vmem:[%s3 + $0x80] sm:$0xff]
        %v774 = vld [vmem:[%s3 + $0x88] sm:$0xff]
        %v775 = vld [vmem:[%s3 + $0xc0] sm:$0xff]
        %v776 = vld [vmem:[%s3 + $0xc8] sm:$0xff]
        %vm777 = vcmask 261120
        %v779 = vsel %vm777, %v611, 0
        %v782 = vsel %vm777, %v616, 0
        %v785 = vsel %vm777, %v621, 0
        %v788 = vsel %vm777, %v626, 0
        %v791 = vsel %vm777, %v631, 0
        %v794 = vsel %vm777, %v636, 0
        %v797 = vsel %vm777, %v641, 0
        %v800 = vsel %vm777, %v646, 0
        %802 = vmatprep.subr.mxu0 %v770
        %803 = vmatpush1.msra.mxu0 %v769
        %804 = vmatprep.subr.mxu0 %v772
        %805 = vmatpush1.msra.mxu0 %v771
        %806 = vmatprep.subr.mxu0 %v774
        %807 = vmatpush1.msra.mxu0 %v773
        %808 = vmatprep.subr.mxu0 %v776
        %809 = vmatpush1.msra.mxu0 %v775
        %810 = vmatprep.subr.mxu0 0.0
        %811 = vmatpush1.msra.mxu0 0.0
        %812 = vmatprep.subr.mxu0 0.0
        %813 = vmatpush1.msra.mxu0 0.0
        %814 = vmatprep.subr.mxu0 0.0
        %815 = vmatpush1.msra.mxu0 0.0
        %816 = vmatprep.subr.mxu0 0.0
        %817 = vmatpush1.msra.mxu0 0.0
        %818 = vmatprep.subr.mxu0 0.0
        %819 = vmatpush1.msra.mxu0 0.0
        %820 = vmatprep.subr.mxu0 0.0
        %821 = vmatpush1.msra.mxu0 0.0
        %822 = vmatprep.subr.mxu0 0.0
        %823 = vmatpush1.msra.mxu0 0.0
        %824 = vmatprep.subr.mxu0 0.0
        %825 = vmatpush1.msra.mxu0 0.0
        %826 = vmatprep.subr.mxu0 0.0
        %827 = vmatpush1.msra.mxu0 0.0
        %828 = vmatprep.subr.mxu0 0.0
        %829 = vmatpush1.msra.mxu0 0.0
        %830 = vmatprep.subr.mxu0 0.0
        %831 = vmatpush1.msra.mxu0 0.0
        %832 = vmatprep.subr.mxu0 0.0
        %833 = vmatpush1.msra.mxu0 0.0
        %834 = vmatprep.subr.mxu0 0.0
        %835 = vmatpush1.msra.mxu0 0.0
        %836 = vmatprep.subr.mxu0 0.0
        %837 = vmatpush1.msra.mxu0 0.0
        %838 = vmatprep.subr.mxu0 0.0
        %839 = vmatpush1.msra.mxu0 0.0
        %840 = vmatprep.subr.mxu0 0.0
        %841 = vmatpush1.msra.mxu0 0.0
        %842 = vmatprep.subr.mxu0 0.0
        %843 = vmatpush1.msra.mxu0 0.0
        %844 = vmatprep.subr.mxu0 0.0
        %845 = vmatpush1.msra.mxu0 0.0
        %846 = vmatprep.subr.mxu0 0.0
        %847 = vmatpush1.msra.mxu0 0.0
        %848 = vmatprep.subr.mxu0 0.0
        %849 = vmatpush1.msra.mxu0 0.0
        %850 = vmatprep.subr.mxu0 0.0
        %851 = vmatpush1.msra.mxu0 0.0
        %852 = vmatprep.subr.mxu0 0.0
        %853 = vmatpush1.msra.mxu0 0.0
        %854 = vmatprep.subr.mxu0 0.0
        %855 = vmatpush1.msra.mxu0 0.0
        %856 = vmatprep.subr.mxu0 0.0
        %857 = vmatpush1.msra.mxu0 0.0
        %858 = vmatprep.subr.mxu0 0.0
        %859 = vmatpush1.msra.mxu0 0.0
        %860 = vmatprep.subr.mxu0 0.0
        %861 = vmatpush1.msra.mxu0 0.0
        %862 = vmatprep.subr.mxu0 0.0
        %863 = vmatpush1.msra.mxu0 0.0
        %864 = vmatprep.subr.mxu0 0.0
        %865 = vmatpush1.msra.mxu0 0.0
        %866 = vmatprep.mubr.f32.mxu0 0.0
        %867 = vmatmul.mubr.f32.gmra.mrb[0].mxu0 %v779
        %v868 = vpop.f32.mrb[0].mxu0
        %v869 = vadd.f32 0.0, %v868
        %v870 = vpop.f32.mrb[0].mxu0
        %871 = vmatprep.mubr.f32.mxu0 0.0
        %872 = vmatmul.mubr.f32.gmra.mrb[0].mxu0 %v782
        %v873 = vpop.f32.mrb[0].mxu0
        %v874 = vadd.f32 0.0, %v873
        %v875 = vpop.f32.mrb[0].mxu0
        %876 = vmatprep.mubr.f32.mxu0 0.0
        %877 = vmatmul.mubr.f32.gmra.mrb[0].mxu0 %v785
        %v878 = vpop.f32.mrb[0].mxu0
        %v879 = vadd.f32 0.0, %v878
        %v880 = vpop.f32.mrb[0].mxu0
        %881 = vmatprep.mubr.f32.mxu0 0.0
        %882 = vmatmul.mubr.f32.gmra.mrb[0].mxu0 %v788
        %v883 = vpop.f32.mrb[0].mxu0
        %v884 = vadd.f32 0.0, %v883
        %v885 = vpop.f32.mrb[0].mxu0
        %886 = vmatprep.mubr.f32.mxu0 0.0
        %887 = vmatmul.mubr.f32.gmra.mrb[0].mxu0 %v791
        %v888 = vpop.f32.mrb[0].mxu0
        %v889 = vpop.f32.mrb[0].mxu0
        %v890 = vadd.f32 0.0, %v889
        %891 = vmatprep.mubr.f32.mxu0 0.0
        %892 = vmatmul.mubr.f32.gmra.mrb[0].mxu0 %v794
        %v893 = vpop.f32.mrb[0].mxu0
        %v894 = vpop.f32.mrb[0].mxu0
        %v895 = vadd.f32 0.0, %v894
        %896 = vmatprep.mubr.f32.mxu0 0.0
        %897 = vmatmul.mubr.f32.gmra.mrb[0].mxu0 %v797
        %v898 = vpop.f32.mrb[0].mxu0
        %v899 = vpop.f32.mrb[0].mxu0
        %v900 = vadd.f32 0.0, %v899
        %901 = vmatprep.mubr.f32.mxu0 0.0
        %902 = vmatmul.mubr.f32.gmra.mrb[0].mxu0 %v800
        %v903 = vpop.f32.mrb[0].mxu0
        %v904 = vpop.f32.mrb[0].mxu0
        %v905 = vadd.f32 0.0, %v904
        %906 = vdwg.mxu0
        %v907 = vadd.f32 %v869, 0.0
        %v908 = vadd.f32 %v874, 0.0
        %911 = vrot.lane.b32.xlu0 %v879, 64
        %v912 = vpop.permute.xlu0 %911
        %913 = vrot.lane.b32.xlu0 %v884, 64
        %v914 = vpop.permute.xlu0 %913
        %v917 = vadd.f32 %v907, %v912
        %v918 = vadd.f32 %v908, %v914
        %v919 = vadd.f32 %v917, %v890
        %v920 = vadd.f32 %v918, %v895
        %923 = vrot.lane.b32.xlu0 %v900, 64
        %v924 = vpop.permute.xlu0 %923
        %925 = vrot.lane.b32.xlu0 %v905, 64
        %v926 = vpop.permute.xlu0 %925
        %v929 = vadd.f32 %v919, %v924
        %v930 = vadd.f32 %v920, %v926
        %v931 = vld [vmem:[%s3 + $0x10] sm:$0xff]
        %v932 = vld [vmem:[%s3 + $0x18] sm:$0xff]
        %v933 = vld [vmem:[%s3 + $0x50] sm:$0xff]
        %v934 = vld [vmem:[%s3 + $0x58] sm:$0xff]
        %v935 = vld [vmem:[%s3 + $0x90] sm:$0xff]
        %v936 = vld [vmem:[%s3 + $0x98] sm:$0xff]
        %v937 = vld [vmem:[%s3 + $0xd0] sm:$0xff]
        %v938 = vld [vmem:[%s3 + $0xd8] sm:$0xff]
        %v940 = vsel %vm777, %v651, 0
        %v943 = vsel %vm777, %v656, 0
        %v946 = vsel %vm777, %v661, 0
        %v949 = vsel %vm777, %v666, 0
        %v952 = vsel %vm777, %v671, 0
        %v955 = vsel %vm777, %v676, 0
        %v958 = vsel %vm777, %v681, 0
        %v961 = vsel %vm777, %v686, 0
        %963 = vmatprep.subr.mxu0 %v932
        %964 = vmatpush1.msra.mxu0 %v931
        %965 = vmatprep.subr.mxu0 %v934
        %966 = vmatpush1.msra.mxu0 %v933
        %967 = vmatprep.subr.mxu0 %v936
        %968 = vmatpush1.msra.mxu0 %v935
        %969 = vmatprep.subr.mxu0 %v938
        %970 = vmatpush1.msra.mxu0 %v937
        %971 = vmatprep.subr.mxu0 0.0
        %972 = vmatpush1.msra.mxu0 0.0
        %973 = vmatprep.subr.mxu0 0.0
        %974 = vmatpush1.msra.mxu0 0.0
        %975 = vmatprep.subr.mxu0 0.0
        %976 = vmatpush1.msra.mxu0 0.0
        %977 = vmatprep.subr.mxu0 0.0
        %978 = vmatpush1.msra.mxu0 0.0
        %979 = vmatprep.subr.mxu0 0.0
        %980 = vmatpush1.msra.mxu0 0.0
        %981 = vmatprep.subr.mxu0 0.0
        %982 = vmatpush1.msra.mxu0 0.0
        %983 = vmatprep.subr.mxu0 0.0
        %984 = vmatpush1.msra.mxu0 0.0
        %985 = vmatprep.subr.mxu0 0.0
        %986 = vmatpush1.msra.mxu0 0.0
        %987 = vmatprep.subr.mxu0 0.0
        %988 = vmatpush1.msra.mxu0 0.0
        %989 = vmatprep.subr.mxu0 0.0
        %990 = vmatpush1.msra.mxu0 0.0
        %991 = vmatprep.subr.mxu0 0.0
        %992 = vmatpush1.msra.mxu0 0.0
        %993 = vmatprep.subr.mxu0 0.0
        %994 = vmatpush1.msra.mxu0 0.0
        %995 = vmatprep.subr.mxu0 0.0
        %996 = vmatpush1.msra.mxu0 0.0
        %997 = vmatprep.subr.mxu0 0.0
        %998 = vmatpush1.msra.mxu0 0.0
        %999 = vmatprep.subr.mxu0 0.0
        %1000 = vmatpush1.msra.mxu0 0.0
        %1001 = vmatprep.subr.mxu0 0.0
        %1002 = vmatpush1.msra.mxu0 0.0
        %1003 = vmatprep.subr.mxu0 0.0
        %1004 = vmatpush1.msra.mxu0 0.0
        %1005 = vmatprep.subr.mxu0 0.0
        %1006 = vmatpush1.msra.mxu0 0.0
        %1007 = vmatprep.subr.mxu0 0.0
        %1008 = vmatpush1.msra.mxu0 0.0
        %1009 = vmatprep.subr.mxu0 0.0
        %1010 = vmatpush1.msra.mxu0 0.0
        %1011 = vmatprep.subr.mxu0 0.0
        %1012 = vmatpush1.msra.mxu0 0.0
        %1013 = vmatprep.subr.mxu0 0.0
        %1014 = vmatpush1.msra.mxu0 0.0
        %1015 = vmatprep.subr.mxu0 0.0
        %1016 = vmatpush1.msra.mxu0 0.0
        %1017 = vmatprep.subr.mxu0 0.0
        %1018 = vmatpush1.msra.mxu0 0.0
        %1019 = vmatprep.subr.mxu0 0.0
        %1020 = vmatpush1.msra.mxu0 0.0
        %1021 = vmatprep.subr.mxu0 0.0
        %1022 = vmatpush1.msra.mxu0 0.0
        %1023 = vmatprep.subr.mxu0 0.0
        %1024 = vmatpush1.msra.mxu0 0.0
        %1025 = vmatprep.subr.mxu0 0.0
        %1026 = vmatpush1.msra.mxu0 0.0
        %1027 = vmatprep.mubr.f32.mxu0 0.0
        %1028 = vmatmul.mubr.f32.gmra.mrb[0].mxu0 %v940
        %v1029 = vpop.f32.mrb[0].mxu0
        %v1030 = vadd.f32 0.0, %v1029
        %v1031 = vpop.f32.mrb[0].mxu0
        %1032 = vmatprep.mubr.f32.mxu0 0.0
        %1033 = vmatmul.mubr.f32.gmra.mrb[0].mxu0 %v943
        %v1034 = vpop.f32.mrb[0].mxu0
        %v1035 = vadd.f32 0.0, %v1034
        %v1036 = vpop.f32.mrb[0].mxu0
        %1037 = vmatprep.mubr.f32.mxu0 0.0
        %1038 = vmatmul.mubr.f32.gmra.mrb[0].mxu0 %v946
        %v1039 = vpop.f32.mrb[0].mxu0
        %v1040 = vadd.f32 0.0, %v1039
        %v1041 = vpop.f32.mrb[0].mxu0
        %1042 = vmatprep.mubr.f32.mxu0 0.0
        %1043 = vmatmul.mubr.f32.gmra.mrb[0].mxu0 %v949
        %v1044 = vpop.f32.mrb[0].mxu0
        %v1045 = vadd.f32 0.0, %v1044
        %v1046 = vpop.f32.mrb[0].mxu0
        %1047 = vmatprep.mubr.f32.mxu0 0.0
        %1048 = vmatmul.mubr.f32.gmra.mrb[0].mxu0 %v952
        %v1049 = vpop.f32.mrb[0].mxu0
        %v1050 = vpop.f32.mrb[0].mxu0
        %v1051 = vadd.f32 0.0, %v1050
        %1052 = vmatprep.mubr.f32.mxu0 0.0
        %1053 = vmatmul.mubr.f32.gmra.mrb[0].mxu0 %v955
        %v1054 = vpop.f32.mrb[0].mxu0
        %v1055 = vpop.f32.mrb[0].mxu0
        %v1056 = vadd.f32 0.0, %v1055
        %1057 = vmatprep.mubr.f32.mxu0 0.0
        %1058 = vmatmul.mubr.f32.gmra.mrb[0].mxu0 %v958
        %v1059 = vpop.f32.mrb[0].mxu0
        %v1060 = vpop.f32.mrb[0].mxu0
        %v1061 = vadd.f32 0.0, %v1060
        %1062 = vmatprep.mubr.f32.mxu0 0.0
        %1063 = vmatmul.mubr.f32.gmra.mrb[0].mxu0 %v961
        %v1064 = vpop.f32.mrb[0].mxu0
        %v1065 = vpop.f32.mrb[0].mxu0
        %v1066 = vadd.f32 0.0, %v1065
        %1067 = vdwg.mxu0
        %v1068 = vadd.f32 %v929, %v1030
        %v1069 = vadd.f32 %v930, %v1035
        %1072 = vrot.lane.b32.xlu0 %v1040, 64
        %v1073 = vpop.permute.xlu0 %1072
        %1074 = vrot.lane.b32.xlu0 %v1045, 64
        %v1075 = vpop.permute.xlu0 %1074
        %v1078 = vadd.f32 %v1068, %v1073
        %v1079 = vadd.f32 %v1069, %v1075
        %v1080 = vadd.f32 %v1078, %v1051
        %v1081 = vadd.f32 %v1079, %v1056
        %1084 = vrot.lane.b32.xlu0 %v1061, 64
        %v1085 = vpop.permute.xlu0 %1084
        %1086 = vrot.lane.b32.xlu0 %v1066, 64
        %v1087 = vpop.permute.xlu0 %1086
        %v1090 = vadd.f32 %v1080, %v1085
        %v1091 = vadd.f32 %v1081, %v1087
        %v1092 = vld [vmem:[%s3 + $0x20] sm:$0xff]
        %v1093 = vld [vmem:[%s3 + $0x28] sm:$0xff]
        %v1094 = vld [vmem:[%s3 + $0x60] sm:$0xff]
        %v1095 = vld [vmem:[%s3 + $0x68] sm:$0xff]
        %v1096 = vld [vmem:[%s3 + $0xa0] sm:$0xff]
        %v1097 = vld [vmem:[%s3 + $0xa8] sm:$0xff]
        %v1098 = vld [vmem:[%s3 + $0xe0] sm:$0xff]
        %v1099 = vld [vmem:[%s3 + $0xe8] sm:$0xff]
        %v1101 = vsel %vm777, %v691, 0
        %v1104 = vsel %vm777, %v696, 0
        %v1107 = vsel %vm777, %v701, 0
        %v1110 = vsel %vm777, %v706, 0
        %v1113 = vsel %vm777, %v711, 0
        %v1116 = vsel %vm777, %v716, 0
        %v1119 = vsel %vm777, %v721, 0
        %v1122 = vsel %vm777, %v726, 0
        %1124 = vmatprep.subr.mxu0 %v1093
        %1125 = vmatpush1.msra.mxu0 %v1092
        %1126 = vmatprep.subr.mxu0 %v1095
        %1127 = vmatpush1.msra.mxu0 %v1094
        %1128 = vmatprep.subr.mxu0 %v1097
        %1129 = vmatpush1.msra.mxu0 %v1096
        %1130 = vmatprep.subr.mxu0 %v1099
        %1131 = vmatpush1.msra.mxu0 %v1098
        %1132 = vmatprep.subr.mxu0 0.0
        %1133 = vmatpush1.msra.mxu0 0.0
        %1134 = vmatprep.subr.mxu0 0.0
        %1135 = vmatpush1.msra.mxu0 0.0
        %1136 = vmatprep.subr.mxu0 0.0
        %1137 = vmatpush1.msra.mxu0 0.0
        %1138 = vmatprep.subr.mxu0 0.0
        %1139 = vmatpush1.msra.mxu0 0.0
        %1140 = vmatprep.subr.mxu0 0.0
        %1141 = vmatpush1.msra.mxu0 0.0
        %1142 = vmatprep.subr.mxu0 0.0
        %1143 = vmatpush1.msra.mxu0 0.0
        %1144 = vmatprep.subr.mxu0 0.0
        %1145 = vmatpush1.msra.mxu0 0.0
        %1146 = vmatprep.subr.mxu0 0.0
        %1147 = vmatpush1.msra.mxu0 0.0
        %1148 = vmatprep.subr.mxu0 0.0
        %1149 = vmatpush1.msra.mxu0 0.0
        %1150 = vmatprep.subr.mxu0 0.0
        %1151 = vmatpush1.msra.mxu0 0.0
        %1152 = vmatprep.subr.mxu0 0.0
        %1153 = vmatpush1.msra.mxu0 0.0
        %1154 = vmatprep.subr.mxu0 0.0
        %1155 = vmatpush1.msra.mxu0 0.0
        %1156 = vmatprep.subr.mxu0 0.0
        %1157 = vmatpush1.msra.mxu0 0.0
        %1158 = vmatprep.subr.mxu0 0.0
        %1159 = vmatpush1.msra.mxu0 0.0
        %1160 = vmatprep.subr.mxu0 0.0
        %1161 = vmatpush1.msra.mxu0 0.0
        %1162 = vmatprep.subr.mxu0 0.0
        %1163 = vmatpush1.msra.mxu0 0.0
        %1164 = vmatprep.subr.mxu0 0.0
        %1165 = vmatpush1.msra.mxu0 0.0
        %1166 = vmatprep.subr.mxu0 0.0
        %1167 = vmatpush1.msra.mxu0 0.0
        %1168 = vmatprep.subr.mxu0 0.0
        %1169 = vmatpush1.msra.mxu0 0.0
        %1170 = vmatprep.subr.mxu0 0.0
        %1171 = vmatpush1.msra.mxu0 0.0
        %1172 = vmatprep.subr.mxu0 0.0
        %1173 = vmatpush1.msra.mxu0 0.0
        %1174 = vmatprep.subr.mxu0 0.0
        %1175 = vmatpush1.msra.mxu0 0.0
        %1176 = vmatprep.subr.mxu0 0.0
        %1177 = vmatpush1.msra.mxu0 0.0
        %1178 = vmatprep.subr.mxu0 0.0
        %1179 = vmatpush1.msra.mxu0 0.0
        %1180 = vmatprep.subr.mxu0 0.0
        %1181 = vmatpush1.msra.mxu0 0.0
        %1182 = vmatprep.subr.mxu0 0.0
        %1183 = vmatpush1.msra.mxu0 0.0
        %1184 = vmatprep.subr.mxu0 0.0
        %1185 = vmatpush1.msra.mxu0 0.0
        %1186 = vmatprep.subr.mxu0 0.0
        %1187 = vmatpush1.msra.mxu0 0.0
        %1188 = vmatprep.mubr.f32.mxu0 0.0
        %1189 = vmatmul.mubr.f32.gmra.mrb[0].mxu0 %v1101
        %v1190 = vpop.f32.mrb[0].mxu0
        %v1191 = vadd.f32 0.0, %v1190
        %v1192 = vpop.f32.mrb[0].mxu0
        %1193 = vmatprep.mubr.f32.mxu0 0.0
        %1194 = vmatmul.mubr.f32.gmra.mrb[0].mxu0 %v1104
        %v1195 = vpop.f32.mrb[0].mxu0
        %v1196 = vadd.f32 0.0, %v1195
        %v1197 = vpop.f32.mrb[0].mxu0
        %1198 = vmatprep.mubr.f32.mxu0 0.0
        %1199 = vmatmul.mubr.f32.gmra.mrb[0].mxu0 %v1107
        %v1200 = vpop.f32.mrb[0].mxu0
        %v1201 = vadd.f32 0.0, %v1200
        %v1202 = vpop.f32.mrb[0].mxu0
        %1203 = vmatprep.mubr.f32.mxu0 0.0
        %1204 = vmatmul.mubr.f32.gmra.mrb[0].mxu0 %v1110
        %v1205 = vpop.f32.mrb[0].mxu0
        %v1206 = vadd.f32 0.0, %v1205
        %v1207 = vpop.f32.mrb[0].mxu0
        %1208 = vmatprep.mubr.f32.mxu0 0.0
        %1209 = vmatmul.mubr.f32.gmra.mrb[0].mxu0 %v1113
        %v1210 = vpop.f32.mrb[0].mxu0
        %v1211 = vpop.f32.mrb[0].mxu0
        %v1212 = vadd.f32 0.0, %v1211
        %1213 = vmatprep.mubr.f32.mxu0 0.0
        %1214 = vmatmul.mubr.f32.gmra.mrb[0].mxu0 %v1116
        %v1215 = vpop.f32.mrb[0].mxu0
        %v1216 = vpop.f32.mrb[0].mxu0
        %v1217 = vadd.f32 0.0, %v1216
        %1218 = vmatprep.mubr.f32.mxu0 0.0
        %1219 = vmatmul.mubr.f32.gmra.mrb[0].mxu0 %v1119
        %v1220 = vpop.f32.mrb[0].mxu0
        %v1221 = vpop.f32.mrb[0].mxu0
        %v1222 = vadd.f32 0.0, %v1221
        %1223 = vmatprep.mubr.f32.mxu0 0.0
        %1224 = vmatmul.mubr.f32.gmra.mrb[0].mxu0 %v1122
        %v1225 = vpop.f32.mrb[0].mxu0
        %v1226 = vpop.f32.mrb[0].mxu0
        %v1227 = vadd.f32 0.0, %v1226
        %1228 = vdwg.mxu0
        %v1229 = vadd.f32 %v1090, %v1191
        %v1230 = vadd.f32 %v1091, %v1196
        %1233 = vrot.lane.b32.xlu0 %v1201, 64
        %v1234 = vpop.permute.xlu0 %1233
        %1235 = vrot.lane.b32.xlu0 %v1206, 64
        %v1236 = vpop.permute.xlu0 %1235
        %v1239 = vadd.f32 %v1229, %v1234
        %v1240 = vadd.f32 %v1230, %v1236
        %v1241 = vadd.f32 %v1239, %v1212
        %v1242 = vadd.f32 %v1240, %v1217
        %1245 = vrot.lane.b32.xlu0 %v1222, 64
        %v1246 = vpop.permute.xlu0 %1245
        %1247 = vrot.lane.b32.xlu0 %v1227, 64
        %v1248 = vpop.permute.xlu0 %1247
        %v1251 = vadd.f32 %v1241, %v1246
        %v1252 = vadd.f32 %v1242, %v1248
        %v1253 = vld [vmem:[%s3 + $0x30] sm:$0xff]
        %v1254 = vld [vmem:[%s3 + $0x38] sm:$0xff]
        %v1255 = vld [vmem:[%s3 + $0x70] sm:$0xff]
        %v1256 = vld [vmem:[%s3 + $0x78] sm:$0xff]
        %v1257 = vld [vmem:[%s3 + $0xb0] sm:$0xff]
        %v1258 = vld [vmem:[%s3 + $0xb8] sm:$0xff]
        %v1259 = vld [vmem:[%s3 + $0xf0] sm:$0xff]
        %v1260 = vld [vmem:[%s3 + $0xf8] sm:$0xff]
        %v1262 = vsel %vm777, %v731, 0
        %v1265 = vsel %vm777, %v736, 0
        %v1268 = vsel %vm777, %v741, 0
        %v1271 = vsel %vm777, %v746, 0
        %v1274 = vsel %vm777, %v751, 0
        %v1277 = vsel %vm777, %v756, 0
        %v1280 = vsel %vm777, %v761, 0
        %v1283 = vsel %vm777, %v766, 0
        %1285 = vmatprep.subr.mxu0 %v1254
        %1286 = vmatpush1.msra.mxu0 %v1253
        %1287 = vmatprep.subr.mxu0 %v1256
        %1288 = vmatpush1.msra.mxu0 %v1255
        %1289 = vmatprep.subr.mxu0 %v1258
        %1290 = vmatpush1.msra.mxu0 %v1257
        %1291 = vmatprep.subr.mxu0 %v1260
        %1292 = vmatpush1.msra.mxu0 %v1259
        %1293 = vmatprep.subr.mxu0 0.0
        %1294 = vmatpush1.msra.mxu0 0.0
        %1295 = vmatprep.subr.mxu0 0.0
        %1296 = vmatpush1.msra.mxu0 0.0
        %1297 = vmatprep.subr.mxu0 0.0
        %1298 = vmatpush1.msra.mxu0 0.0
        %1299 = vmatprep.subr.mxu0 0.0
        %1300 = vmatpush1.msra.mxu0 0.0
        %1301 = vmatprep.subr.mxu0 0.0
        %1302 = vmatpush1.msra.mxu0 0.0
        %1303 = vmatprep.subr.mxu0 0.0
        %1304 = vmatpush1.msra.mxu0 0.0
        %1305 = vmatprep.subr.mxu0 0.0
        %1306 = vmatpush1.msra.mxu0 0.0
        %1307 = vmatprep.subr.mxu0 0.0
        %1308 = vmatpush1.msra.mxu0 0.0
        %1309 = vmatprep.subr.mxu0 0.0
        %1310 = vmatpush1.msra.mxu0 0.0
        %1311 = vmatprep.subr.mxu0 0.0
        %1312 = vmatpush1.msra.mxu0 0.0
        %1313 = vmatprep.subr.mxu0 0.0
        %1314 = vmatpush1.msra.mxu0 0.0
        %1315 = vmatprep.subr.mxu0 0.0
        %1316 = vmatpush1.msra.mxu0 0.0
        %1317 = vmatprep.subr.mxu0 0.0
        %1318 = vmatpush1.msra.mxu0 0.0
        %1319 = vmatprep.subr.mxu0 0.0
        %1320 = vmatpush1.msra.mxu0 0.0
        %1321 = vmatprep.subr.mxu0 0.0
        %1322 = vmatpush1.msra.mxu0 0.0
        %1323 = vmatprep.subr.mxu0 0.0
        %1324 = vmatpush1.msra.mxu0 0.0
        %1325 = vmatprep.subr.mxu0 0.0
        %1326 = vmatpush1.msra.mxu0 0.0
        %1327 = vmatprep.subr.mxu0 0.0
        %1328 = vmatpush1.msra.mxu0 0.0
        %1329 = vmatprep.subr.mxu0 0.0
        %1330 = vmatpush1.msra.mxu0 0.0
        %1331 = vmatprep.subr.mxu0 0.0
        %1332 = vmatpush1.msra.mxu0 0.0
        %1333 = vmatprep.subr.mxu0 0.0
        %1334 = vmatpush1.msra.mxu0 0.0
        %1335 = vmatprep.subr.mxu0 0.0
        %1336 = vmatpush1.msra.mxu0 0.0
        %1337 = vmatprep.subr.mxu0 0.0
        %1338 = vmatpush1.msra.mxu0 0.0
        %1339 = vmatprep.subr.mxu0 0.0
        %1340 = vmatpush1.msra.mxu0 0.0
        %1341 = vmatprep.subr.mxu0 0.0
        %1342 = vmatpush1.msra.mxu0 0.0
        %1343 = vmatprep.subr.mxu0 0.0
        %1344 = vmatpush1.msra.mxu0 0.0
        %1345 = vmatprep.subr.mxu0 0.0
        %1346 = vmatpush1.msra.mxu0 0.0
        %1347 = vmatprep.subr.mxu0 0.0
        %1348 = vmatpush1.msra.mxu0 0.0
        %1349 = vmatprep.mubr.f32.mxu0 0.0
        %1350 = vmatmul.mubr.f32.gmra.mrb[0].mxu0 %v1262
        %v1351 = vpop.f32.mrb[0].mxu0
        %v1352 = vadd.f32 0.0, %v1351
        %v1353 = vpop.f32.mrb[0].mxu0
        %1354 = vmatprep.mubr.f32.mxu0 0.0
        %1355 = vmatmul.mubr.f32.gmra.mrb[0].mxu0 %v1265
        %v1356 = vpop.f32.mrb[0].mxu0
        %v1357 = vadd.f32 0.0, %v1356
        %v1358 = vpop.f32.mrb[0].mxu0
        %1359 = vmatprep.mubr.f32.mxu0 0.0
        %1360 = vmatmul.mubr.f32.gmra.mrb[0].mxu0 %v1268
        %v1361 = vpop.f32.mrb[0].mxu0
        %v1362 = vadd.f32 0.0, %v1361
        %v1363 = vpop.f32.mrb[0].mxu0
        %1364 = vmatprep.mubr.f32.mxu0 0.0
        %1365 = vmatmul.mubr.f32.gmra.mrb[0].mxu0 %v1271
        %v1366 = vpop.f32.mrb[0].mxu0
        %v1367 = vadd.f32 0.0, %v1366
        %v1368 = vpop.f32.mrb[0].mxu0
        %1369 = vmatprep.mubr.f32.mxu0 0.0
        %1370 = vmatmul.mubr.f32.gmra.mrb[0].mxu0 %v1274
        %v1371 = vpop.f32.mrb[0].mxu0
        %v1372 = vpop.f32.mrb[0].mxu0
        %v1373 = vadd.f32 0.0, %v1372
        %1374 = vmatprep.mubr.f32.mxu0 0.0
        %1375 = vmatmul.mubr.f32.gmra.mrb[0].mxu0 %v1277
        %v1376 = vpop.f32.mrb[0].mxu0
        %v1377 = vpop.f32.mrb[0].mxu0
        %v1378 = vadd.f32 0.0, %v1377
        %1379 = vmatprep.mubr.f32.mxu0 0.0
        %1380 = vmatmul.mubr.f32.gmra.mrb[0].mxu0 %v1280
        %v1381 = vpop.f32.mrb[0].mxu0
        %v1382 = vpop.f32.mrb[0].mxu0
        %v1383 = vadd.f32 0.0, %v1382
        %1384 = vmatprep.mubr.f32.mxu0 0.0
        %1385 = vmatmul.mubr.f32.gmra.mrb[0].mxu0 %v1283
        %v1386 = vpop.f32.mrb[0].mxu0
        %v1387 = vpop.f32.mrb[0].mxu0
        %v1388 = vadd.f32 0.0, %v1387
        %1389 = vdwg.mxu0
        %v1390 = vadd.f32 %v1251, %v1352
        %v1391 = vadd.f32 %v1252, %v1357
        %1394 = vrot.lane.b32.xlu0 %v1362, 64
        %v1395 = vpop.permute.xlu0 %1394
        %1396 = vrot.lane.b32.xlu0 %v1367, 64
        %v1397 = vpop.permute.xlu0 %1396
        %v1400 = vadd.f32 %v1390, %v1395
        %v1401 = vadd.f32 %v1391, %v1397
        %v1402 = vadd.f32 %v1400, %v1373
        %v1403 = vadd.f32 %v1401, %v1378
        %1406 = vrot.lane.b32.xlu0 %v1383, 64
        %v1407 = vpop.permute.xlu0 %1406
        %1408 = vrot.lane.b32.xlu0 %v1388, 64
        %v1409 = vpop.permute.xlu0 %1408
        %v1412 = vadd.f32 %v1402, %v1407
        %v1413 = vadd.f32 %v1403, %v1409
        %v1415 = vlaneseq
        %v1416 = vshrl.u32 %v1415, 7
        %v1417 = vsub.s32 0, %v1416
        %v1418 = vrot.slane %v414, %v1417
        %v1420 = vadd.f32 %v1412, %v1418
        %v1421 = vadd.f32 %v1413, %v1418
        %v1422 = vmax.f32 %v1420, 0.0
        %v1423 = vmax.f32 %v1421, 0.0
        %v1424 = vld [vmem:[%s5 + $0x2] sm:$0x1]
        %v1425 = vld [vmem:[%s2 + $0x100] sm:$0xff]
        %v1426 = vld [vmem:[%s2 + $0x108] sm:$0xff]
        %v1427 = vld [vmem:[%s2 + $0x110] sm:$0xff]
        %v1428 = vld [vmem:[%s2 + $0x118] sm:$0xff]
        %v1429 = vld [vmem:[%s2 + $0x120] sm:$0xff]
        %v1430 = vld [vmem:[%s2 + $0x128] sm:$0xff]
        %v1431 = vld [vmem:[%s2 + $0x130] sm:$0xff]
        %v1432 = vld [vmem:[%s2 + $0x138] sm:$0xff]
        %v1433 = vld [vmem:[%s2 + $0x140] sm:$0xff]
        %v1434 = vld [vmem:[%s2 + $0x148] sm:$0xff]
        %v1435 = vld [vmem:[%s2 + $0x150] sm:$0xff]
        %v1436 = vld [vmem:[%s2 + $0x158] sm:$0xff]
        %v1437 = vld [vmem:[%s2 + $0x160] sm:$0xff]
        %v1438 = vld [vmem:[%s2 + $0x168] sm:$0xff]
        %v1439 = vld [vmem:[%s2 + $0x170] sm:$0xff]
        %v1440 = vld [vmem:[%s2 + $0x178] sm:$0xff]
        %v1441 = vld [vmem:[%s2 + $0x180] sm:$0xff]
        %v1442 = vld [vmem:[%s2 + $0x188] sm:$0xff]
        %vm1443 = vcmask 130048
        %v1445 = vsel %vm1443, %v1425, 0
        %v1448 = vsel %vm1443, %v1426, 0
        %v1451 = vsel %vm1443, %v1427, 0
        %v1454 = vsel %vm1443, %v1428, 0
        %v1457 = vsel %vm1443, %v1429, 0
        %v1460 = vsel %vm1443, %v1430, 0
        %v1463 = vsel %vm1443, %v1431, 0
        %v1466 = vsel %vm1443, %v1432, 0
        %v1469 = vsel %vm1443, %v1433, 0
        %v1472 = vsel %vm1443, %v1434, 0
        %v1475 = vsel %vm1443, %v1435, 0
        %v1478 = vsel %vm1443, %v1436, 0
        %v1481 = vsel %vm1443, %v1437, 0
        %v1484 = vsel %vm1443, %v1438, 0
        %v1487 = vsel %vm1443, %v1439, 0
        %v1490 = vsel %vm1443, %v1440, 0
        %v1493 = vsel %vm1443, %v1441, 0
        %v1496 = vsel %vm1443, %v1442, 0
        %1498 = vmatprep.subr.mxu0 0.0
        %1499 = vmatpush1.msra.mxu0 %v1422
        %1500 = vmatprep.subr.mxu0 0.0
        %1501 = vmatpush1.msra.mxu0 %v1423
        %1502 = vmatprep.subr.mxu0 0.0
        %1503 = vmatpush1.msra.mxu0 0.0
        %1504 = vmatprep.subr.mxu0 0.0
        %1505 = vmatpush1.msra.mxu0 0.0
        %1506 = vmatprep.subr.mxu0 0.0
        %1507 = vmatpush1.msra.mxu0 0.0
        %1508 = vmatprep.subr.mxu0 0.0
        %1509 = vmatpush1.msra.mxu0 0.0
        %1510 = vmatprep.subr.mxu0 0.0
        %1511 = vmatpush1.msra.mxu0 0.0
        %1512 = vmatprep.subr.mxu0 0.0
        %1513 = vmatpush1.msra.mxu0 0.0
        %1514 = vmatprep.subr.mxu0 0.0
        %1515 = vmatpush1.msra.mxu0 0.0
        %1516 = vmatprep.subr.mxu0 0.0
        %1517 = vmatpush1.msra.mxu0 0.0
        %1518 = vmatprep.subr.mxu0 0.0
        %1519 = vmatpush1.msra.mxu0 0.0
        %1520 = vmatprep.subr.mxu0 0.0
        %1521 = vmatpush1.msra.mxu0 0.0
        %1522 = vmatprep.subr.mxu0 0.0
        %1523 = vmatpush1.msra.mxu0 0.0
        %1524 = vmatprep.subr.mxu0 0.0
        %1525 = vmatpush1.msra.mxu0 0.0
        %1526 = vmatprep.subr.mxu0 0.0
        %1527 = vmatpush1.msra.mxu0 0.0
        %1528 = vmatprep.subr.mxu0 0.0
        %1529 = vmatpush1.msra.mxu0 0.0
        %1530 = vmatprep.subr.mxu0 0.0
        %1531 = vmatpush1.msra.mxu0 0.0
        %1532 = vmatprep.subr.mxu0 0.0
        %1533 = vmatpush1.msra.mxu0 0.0
        %1534 = vmatprep.subr.mxu0 0.0
        %1535 = vmatpush1.msra.mxu0 0.0
        %1536 = vmatprep.subr.mxu0 0.0
        %1537 = vmatpush1.msra.mxu0 0.0
        %1538 = vmatprep.subr.mxu0 0.0
        %1539 = vmatpush1.msra.mxu0 0.0
        %1540 = vmatprep.subr.mxu0 0.0
        %1541 = vmatpush1.msra.mxu0 0.0
        %1542 = vmatprep.subr.mxu0 0.0
        %1543 = vmatpush1.msra.mxu0 0.0
        %1544 = vmatprep.subr.mxu0 0.0
        %1545 = vmatpush1.msra.mxu0 0.0
        %1546 = vmatprep.subr.mxu0 0.0
        %1547 = vmatpush1.msra.mxu0 0.0
        %1548 = vmatprep.subr.mxu0 0.0
        %1549 = vmatpush1.msra.mxu0 0.0
        %1550 = vmatprep.subr.mxu0 0.0
        %1551 = vmatpush1.msra.mxu0 0.0
        %1552 = vmatprep.subr.mxu0 0.0
        %1553 = vmatpush1.msra.mxu0 0.0
        %1554 = vmatprep.subr.mxu0 0.0
        %1555 = vmatpush1.msra.mxu0 0.0
        %1556 = vmatprep.subr.mxu0 0.0
        %1557 = vmatpush1.msra.mxu0 0.0
        %1558 = vmatprep.subr.mxu0 0.0
        %1559 = vmatpush1.msra.mxu0 0.0
        %1560 = vmatprep.subr.mxu0 0.0
        %1561 = vmatpush1.msra.mxu0 0.0
        %1562 = vmatprep.mubr.f32.mxu0 0.0
        %1563 = vmatmul.mubr.f32.gmra.mrb[0].mxu0 %v1445
        %v1564 = vpop.f32.mrb[0].mxu0
        %v1565 = vadd.f32 0.0, %v1564
        %v1566 = vpop.f32.mrb[0].mxu0
        %1567 = vmatprep.mubr.f32.mxu0 0.0
        %1568 = vmatmul.mubr.f32.gmra.mrb[0].mxu0 %v1448
        %v1569 = vpop.f32.mrb[0].mxu0
        %v1570 = vadd.f32 0.0, %v1569
        %v1571 = vpop.f32.mrb[0].mxu0
        %1572 = vmatprep.mubr.f32.mxu0 0.0
        %1573 = vmatmul.mubr.f32.gmra.mrb[0].mxu0 %v1451
        %v1574 = vpop.f32.mrb[0].mxu0
        %v1575 = vadd.f32 0.0, %v1574
        %v1576 = vpop.f32.mrb[0].mxu0
        %1577 = vmatprep.mubr.f32.mxu0 0.0
        %1578 = vmatmul.mubr.f32.gmra.mrb[0].mxu0 %v1454
        %v1579 = vpop.f32.mrb[0].mxu0
        %v1580 = vadd.f32 0.0, %v1579
        %v1581 = vpop.f32.mrb[0].mxu0
        %1582 = vmatprep.mubr.f32.mxu0 0.0
        %1583 = vmatmul.mubr.f32.gmra.mrb[0].mxu0 %v1457
        %v1584 = vpop.f32.mrb[0].mxu0
        %v1585 = vadd.f32 0.0, %v1584
        %v1586 = vpop.f32.mrb[0].mxu0
        %1587 = vmatprep.mubr.f32.mxu0 0.0
        %1588 = vmatmul.mubr.f32.gmra.mrb[0].mxu0 %v1460
        %v1589 = vpop.f32.mrb[0].mxu0
        %v1590 = vadd.f32 0.0, %v1589
        %v1591 = vpop.f32.mrb[0].mxu0
        %1592 = vmatprep.mubr.f32.mxu0 0.0
        %1593 = vmatmul.mubr.f32.gmra.mrb[0].mxu0 %v1463
        %v1594 = vpop.f32.mrb[0].mxu0
        %v1595 = vadd.f32 0.0, %v1594
        %v1596 = vpop.f32.mrb[0].mxu0
        %1597 = vmatprep.mubr.f32.mxu0 0.0
        %1598 = vmatmul.mubr.f32.gmra.mrb[0].mxu0 %v1466
        %v1599 = vpop.f32.mrb[0].mxu0
        %v1600 = vadd.f32 0.0, %v1599
        %v1601 = vpop.f32.mrb[0].mxu0
        %1602 = vmatprep.mubr.f32.mxu0 0.0
        %1603 = vmatmul.mubr.f32.gmra.mrb[0].mxu0 %v1469
        %v1604 = vpop.f32.mrb[0].mxu0
        %v1605 = vadd.f32 0.0, %v1604
        %v1606 = vpop.f32.mrb[0].mxu0
        %1607 = vmatprep.mubr.f32.mxu0 0.0
        %1608 = vmatmul.mubr.f32.gmra.mrb[0].mxu0 %v1472
        %v1609 = vpop.f32.mrb[0].mxu0
        %v1610 = vadd.f32 0.0, %v1609
        %v1611 = vpop.f32.mrb[0].mxu0
        %1612 = vmatprep.mubr.f32.mxu0 0.0
        %1613 = vmatmul.mubr.f32.gmra.mrb[0].mxu0 %v1475
        %v1614 = vpop.f32.mrb[0].mxu0
        %v1615 = vadd.f32 0.0, %v1614
        %v1616 = vpop.f32.mrb[0].mxu0
        %1617 = vmatprep.mubr.f32.mxu0 0.0
        %1618 = vmatmul.mubr.f32.gmra.mrb[0].mxu0 %v1478
        %v1619 = vpop.f32.mrb[0].mxu0
        %v1620 = vadd.f32 0.0, %v1619
        %v1621 = vpop.f32.mrb[0].mxu0
        %1622 = vmatprep.mubr.f32.mxu0 0.0
        %1623 = vmatmul.mubr.f32.gmra.mrb[0].mxu0 %v1481
        %v1624 = vpop.f32.mrb[0].mxu0
        %v1625 = vadd.f32 0.0, %v1624
        %v1626 = vpop.f32.mrb[0].mxu0
        %1627 = vmatprep.mubr.f32.mxu0 0.0
        %1628 = vmatmul.mubr.f32.gmra.mrb[0].mxu0 %v1484
        %v1629 = vpop.f32.mrb[0].mxu0
        %v1630 = vadd.f32 0.0, %v1629
        %v1631 = vpop.f32.mrb[0].mxu0
        %1632 = vmatprep.mubr.f32.mxu0 0.0
        %1633 = vmatmul.mubr.f32.gmra.mrb[0].mxu0 %v1487
        %v1634 = vpop.f32.mrb[0].mxu0
        %v1635 = vadd.f32 0.0, %v1634
        %v1636 = vpop.f32.mrb[0].mxu0
        %1637 = vmatprep.mubr.f32.mxu0 0.0
        %1638 = vmatmul.mubr.f32.gmra.mrb[0].mxu0 %v1490
        %v1639 = vpop.f32.mrb[0].mxu0
        %v1640 = vadd.f32 0.0, %v1639
        %v1641 = vpop.f32.mrb[0].mxu0
        %1642 = vmatprep.mubr.f32.mxu0 0.0
        %1643 = vmatmul.mubr.f32.gmra.mrb[0].mxu0 %v1493
        %v1644 = vpop.f32.mrb[0].mxu0
        %v1645 = vadd.f32 0.0, %v1644
        %v1646 = vpop.f32.mrb[0].mxu0
        %1647 = vmatprep.mubr.f32.mxu0 0.0
        %1648 = vmatmul.mubr.f32.gmra.mrb[0].mxu0 %v1496
        %v1649 = vpop.f32.mrb[0].mxu0
        %v1650 = vadd.f32 0.0, %v1649
        %v1651 = vpop.f32.mrb[0].mxu0
        %1652 = vdwg.mxu0
        %v1653 = vld [vmem:[%s3 + $0x100] sm:$0xff]
        %v1654 = vld [vmem:[%s3 + $0x108] sm:$0xff]
        %v1655 = vld [vmem:[%s3 + $0x140] sm:$0xff]
        %v1656 = vld [vmem:[%s3 + $0x148] sm:$0xff]
        %v1657 = vld [vmem:[%s3 + $0x180] sm:$0xff]
        %v1658 = vld [vmem:[%s3 + $0x188] sm:$0xff]
        %v1659 = vld [vmem:[%s3 + $0x1c0] sm:$0xff]
        %v1660 = vld [vmem:[%s3 + $0x1c8] sm:$0xff]
        %v1661 = vld [vmem:[%s3 + $0x200] sm:$0xff]
        %v1662 = vld [vmem:[%s3 + $0x208] sm:$0xff]
        %v1663 = vld [vmem:[%s3 + $0x240] sm:$0xff]
        %v1664 = vld [vmem:[%s3 + $0x248] sm:$0xff]
        %v1665 = vld [vmem:[%s3 + $0x280] sm:$0xff]
        %v1666 = vld [vmem:[%s3 + $0x288] sm:$0xff]
        %v1667 = vld [vmem:[%s3 + $0x2c0] sm:$0xff]
        %v1668 = vld [vmem:[%s3 + $0x2c8] sm:$0xff]
        %v1670 = vsel %vm285, %v1565, 0
        %v1673 = vsel %vm285, %v1570, 0
        %v1676 = vsel %vm285, %v1575, 0
        %v1679 = vsel %vm285, %v1580, 0
        %v1682 = vsel %vm285, %v1585, 0
        %v1685 = vsel %vm285, %v1590, 0
        %1687 = vmatprep.subr.mxu0 %v1654
        %1688 = vmatpush1.msra.mxu0 %v1653
        %1689 = vmatprep.subr.mxu0 %v1656
        %1690 = vmatpush1.msra.mxu0 %v1655
        %1691 = vmatprep.subr.mxu0 %v1658
        %1692 = vmatpush1.msra.mxu0 %v1657
        %1693 = vmatprep.subr.mxu0 %v1660
        %1694 = vmatpush1.msra.mxu0 %v1659
        %1695 = vmatprep.subr.mxu0 %v1662
        %1696 = vmatpush1.msra.mxu0 %v1661
        %1697 = vmatprep.subr.mxu0 %v1664
        %1698 = vmatpush1.msra.mxu0 %v1663
        %1699 = vmatprep.subr.mxu0 %v1666
        %1700 = vmatpush1.msra.mxu0 %v1665
        %1701 = vmatprep.subr.mxu0 %v1668
        %1702 = vmatpush1.msra.mxu0 %v1667
        %1703 = vmatprep.subr.mxu0 0.0
        %1704 = vmatpush1.msra.mxu0 0.0
        %1705 = vmatprep.subr.mxu0 0.0
        %1706 = vmatpush1.msra.mxu0 0.0
        %1707 = vmatprep.subr.mxu0 0.0
        %1708 = vmatpush1.msra.mxu0 0.0
        %1709 = vmatprep.subr.mxu0 0.0
        %1710 = vmatpush1.msra.mxu0 0.0
        %1711 = vmatprep.subr.mxu0 0.0
        %1712 = vmatpush1.msra.mxu0 0.0
        %1713 = vmatprep.subr.mxu0 0.0
        %1714 = vmatpush1.msra.mxu0 0.0
        %1715 = vmatprep.subr.mxu0 0.0
        %1716 = vmatpush1.msra.mxu0 0.0
        %1717 = vmatprep.subr.mxu0 0.0
        %1718 = vmatpush1.msra.mxu0 0.0
        %1719 = vmatprep.subr.mxu0 0.0
        %1720 = vmatpush1.msra.mxu0 0.0
        %1721 = vmatprep.subr.mxu0 0.0
        %1722 = vmatpush1.msra.mxu0 0.0
        %1723 = vmatprep.subr.mxu0 0.0
        %1724 = vmatpush1.msra.mxu0 0.0
        %1725 = vmatprep.subr.mxu0 0.0
        %1726 = vmatpush1.msra.mxu0 0.0
        %1727 = vmatprep.subr.mxu0 0.0
        %1728 = vmatpush1.msra.mxu0 0.0
        %1729 = vmatprep.subr.mxu0 0.0
        %1730 = vmatpush1.msra.mxu0 0.0
        %1731 = vmatprep.subr.mxu0 0.0
        %1732 = vmatpush1.msra.mxu0 0.0
        %1733 = vmatprep.subr.mxu0 0.0
        %1734 = vmatpush1.msra.mxu0 0.0
        %1735 = vmatprep.subr.mxu0 0.0
        %1736 = vmatpush1.msra.mxu0 0.0
        %1737 = vmatprep.subr.mxu0 0.0
        %1738 = vmatpush1.msra.mxu0 0.0
        %1739 = vmatprep.subr.mxu0 0.0
        %1740 = vmatpush1.msra.mxu0 0.0
        %1741 = vmatprep.subr.mxu0 0.0
        %1742 = vmatpush1.msra.mxu0 0.0
        %1743 = vmatprep.subr.mxu0 0.0
        %1744 = vmatpush1.msra.mxu0 0.0
        %1745 = vmatprep.subr.mxu0 0.0
        %1746 = vmatpush1.msra.mxu0 0.0
        %1747 = vmatprep.subr.mxu0 0.0
        %1748 = vmatpush1.msra.mxu0 0.0
        %1749 = vmatprep.subr.mxu0 0.0
        %1750 = vmatpush1.msra.mxu0 0.0
        %1751 = vmatprep.mubr.f32.mxu0 0.0
        %1752 = vmatmul.mubr.f32.gmra.mrb[0].mxu0 %v1670
        %v1753 = vpop.f32.mrb[0].mxu0
        %v1754 = vadd.f32 0.0, %v1753
        %v1755 = vpop.f32.mrb[0].mxu0
        %1756 = vmatprep.mubr.f32.mxu0 0.0
        %1757 = vmatmul.mubr.f32.gmra.mrb[0].mxu0 %v1673
        %v1758 = vpop.f32.mrb[0].mxu0
        %v1759 = vadd.f32 0.0, %v1758
        %v1760 = vpop.f32.mrb[0].mxu0
        %1761 = vmatprep.mubr.f32.mxu0 0.0
        %1762 = vmatmul.mubr.f32.gmra.mrb[0].mxu0 %v1676
        %v1763 = vpop.f32.mrb[0].mxu0
        %v1764 = vadd.f32 0.0, %v1763
        %v1765 = vpop.f32.mrb[0].mxu0
        %1766 = vmatprep.mubr.f32.mxu0 0.0
        %1767 = vmatmul.mubr.f32.gmra.mrb[0].mxu0 %v1679
        %v1768 = vpop.f32.mrb[0].mxu0
        %v1769 = vadd.f32 0.0, %v1768
        %v1770 = vpop.f32.mrb[0].mxu0
        %1771 = vmatprep.mubr.f32.mxu0 0.0
        %1772 = vmatmul.mubr.f32.gmra.mrb[0].mxu0 %v1682
        %v1773 = vpop.f32.mrb[0].mxu0
        %v1774 = vpop.f32.mrb[0].mxu0
        %v1775 = vadd.f32 0.0, %v1774
        %1776 = vmatprep.mubr.f32.mxu0 0.0
        %1777 = vmatmul.mubr.f32.gmra.mrb[0].mxu0 %v1685
        %v1778 = vpop.f32.mrb[0].mxu0
        %v1779 = vpop.f32.mrb[0].mxu0
        %v1780 = vadd.f32 0.0, %v1779
        %1781 = vdwg.mxu0
        %v1782 = vadd.f32 %v1754, 0.0
        %v1783 = vadd.f32 %v1759, 0.0
        %1786 = vrot.lane.b32.xlu0 %v1764, 64
        %v1787 = vpop.permute.xlu0 %1786
        %1788 = vrot.lane.b32.xlu0 %v1769, 64
        %v1789 = vpop.permute.xlu0 %1788
        %v1792 = vadd.f32 %v1782, %v1787
        %v1793 = vadd.f32 %v1783, %v1789
        %v1794 = vadd.f32 %v1792, %v1775
        %v1795 = vadd.f32 %v1793, %v1780
        %v1796 = vld [vmem:[%s3 + $0x108] sm:$0xff]
        %v1797 = vld [vmem:[%s3 + $0x110] sm:$0xff]
        %v1798 = vld [vmem:[%s3 + $0x148] sm:$0xff]
        %v1799 = vld [vmem:[%s3 + $0x150] sm:$0xff]
        %v1800 = vld [vmem:[%s3 + $0x188] sm:$0xff]
        %v1801 = vld [vmem:[%s3 + $0x190] sm:$0xff]
        %v1802 = vld [vmem:[%s3 + $0x1c8] sm:$0xff]
        %v1803 = vld [vmem:[%s3 + $0x1d0] sm:$0xff]
        %v1804 = vld [vmem:[%s3 + $0x208] sm:$0xff]
        %v1805 = vld [vmem:[%s3 + $0x210] sm:$0xff]
        %v1806 = vld [vmem:[%s3 + $0x248] sm:$0xff]
        %v1807 = vld [vmem:[%s3 + $0x250] sm:$0xff]
        %v1808 = vld [vmem:[%s3 + $0x288] sm:$0xff]
        %v1809 = vld [vmem:[%s3 + $0x290] sm:$0xff]
        %v1810 = vld [vmem:[%s3 + $0x2c8] sm:$0xff]
        %v1811 = vld [vmem:[%s3 + $0x2d0] sm:$0xff]
        %1828 = vrot.lane.b32.xlu0 %v1796, 64
        %v1829 = vpop.permute.xlu0 %1828
        %1830 = vrot.lane.b32.xlu0 %v1797, 64
        %v1831 = vpop.permute.xlu0 %1830
        %1832 = vrot.lane.b32.xlu0 %v1798, 64
        %v1833 = vpop.permute.xlu0 %1832
        %1834 = vrot.lane.b32.xlu0 %v1799, 64
        %v1835 = vpop.permute.xlu0 %1834
        %1836 = vrot.lane.b32.xlu0 %v1800, 64
        %v1837 = vpop.permute.xlu0 %1836
        %1838 = vrot.lane.b32.xlu0 %v1801, 64
        %v1839 = vpop.permute.xlu0 %1838
        %1840 = vrot.lane.b32.xlu0 %v1802, 64
        %v1841 = vpop.permute.xlu0 %1840
        %1842 = vrot.lane.b32.xlu0 %v1803, 64
        %v1843 = vpop.permute.xlu0 %1842
        %1844 = vrot.lane.b32.xlu0 %v1804, 64
        %v1845 = vpop.permute.xlu0 %1844
        %1846 = vrot.lane.b32.xlu0 %v1805, 64
        %v1847 = vpop.permute.xlu0 %1846
        %1848 = vrot.lane.b32.xlu0 %v1806, 64
        %v1849 = vpop.permute.xlu0 %1848
        %1850 = vrot.lane.b32.xlu0 %v1807, 64
        %v1851 = vpop.permute.xlu0 %1850
        %1852 = vrot.lane.b32.xlu0 %v1808, 64
        %v1853 = vpop.permute.xlu0 %1852
        %1854 = vrot.lane.b32.xlu0 %v1809, 64
        %v1855 = vpop.permute.xlu0 %1854
        %1856 = vrot.lane.b32.xlu0 %v1810, 64
        %v1857 = vpop.permute.xlu0 %1856
        %1858 = vrot.lane.b32.xlu0 %v1811, 64
        %v1859 = vpop.permute.xlu0 %1858
        %v1860 = vsel %vm285, %v1829, %v1831
        %v1861 = vsel %vm285, %v1833, %v1835
        %v1862 = vsel %vm285, %v1837, %v1839
        %v1863 = vsel %vm285, %v1841, %v1843
        %v1864 = vsel %vm285, %v1845, %v1847
        %v1865 = vsel %vm285, %v1849, %v1851
        %v1866 = vsel %vm285, %v1853, %v1855
        %v1867 = vsel %vm285, %v1857, %v1859
        %v1885 = vsel %vm285, %v1595, 0
        %v1888 = vsel %vm285, %v1600, 0
        %v1891 = vsel %vm285, %v1605, 0
        %v1894 = vsel %vm285, %v1610, 0
        %v1897 = vsel %vm285, %v1615, 0
        %v1900 = vsel %vm285, %v1620, 0
        %1902 = vmatprep.subr.mxu0 %v1831
        %1903 = vmatpush1.msra.mxu0 %v1860
        %1904 = vmatprep.subr.mxu0 %v1835
        %1905 = vmatpush1.msra.mxu0 %v1861
        %1906 = vmatprep.subr.mxu0 %v1839
        %1907 = vmatpush1.msra.mxu0 %v1862
        %1908 = vmatprep.subr.mxu0 %v1843
        %1909 = vmatpush1.msra.mxu0 %v1863
        %1910 = vmatprep.subr.mxu0 %v1847
        %1911 = vmatpush1.msra.mxu0 %v1864
        %1912 = vmatprep.subr.mxu0 %v1851
        %1913 = vmatpush1.msra.mxu0 %v1865
        %1914 = vmatprep.subr.mxu0 %v1855
        %1915 = vmatpush1.msra.mxu0 %v1866
        %1916 = vmatprep.subr.mxu0 %v1859
        %1917 = vmatpush1.msra.mxu0 %v1867
        %1918 = vmatprep.subr.mxu0 0.0
        %1919 = vmatpush1.msra.mxu0 0.0
        %1920 = vmatprep.subr.mxu0 0.0
        %1921 = vmatpush1.msra.mxu0 0.0
        %1922 = vmatprep.subr.mxu0 0.0
        %1923 = vmatpush1.msra.mxu0 0.0
        %1924 = vmatprep.subr.mxu0 0.0
        %1925 = vmatpush1.msra.mxu0 0.0
        %1926 = vmatprep.subr.mxu0 0.0
        %1927 = vmatpush1.msra.mxu0 0.0
        %1928 = vmatprep.subr.mxu0 0.0
        %1929 = vmatpush1.msra.mxu0 0.0
        %1930 = vmatprep.subr.mxu0 0.0
        %1931 = vmatpush1.msra.mxu0 0.0
        %1932 = vmatprep.subr.mxu0 0.0
        %1933 = vmatpush1.msra.mxu0 0.0
        %1934 = vmatprep.subr.mxu0 0.0
        %1935 = vmatpush1.msra.mxu0 0.0
        %1936 = vmatprep.subr.mxu0 0.0
        %1937 = vmatpush1.msra.mxu0 0.0
        %1938 = vmatprep.subr.mxu0 0.0
        %1939 = vmatpush1.msra.mxu0 0.0
        %1940 = vmatprep.subr.mxu0 0.0
        %1941 = vmatpush1.msra.mxu0 0.0
        %1942 = vmatprep.subr.mxu0 0.0
        %1943 = vmatpush1.msra.mxu0 0.0
        %1944 = vmatprep.subr.mxu0 0.0
        %1945 = vmatpush1.msra.mxu0 0.0
        %1946 = vmatprep.subr.mxu0 0.0
        %1947 = vmatpush1.msra.mxu0 0.0
        %1948 = vmatprep.subr.mxu0 0.0
        %1949 = vmatpush1.msra.mxu0 0.0
        %1950 = vmatprep.subr.mxu0 0.0
        %1951 = vmatpush1.msra.mxu0 0.0
        %1952 = vmatprep.subr.mxu0 0.0
        %1953 = vmatpush1.msra.mxu0 0.0
        %1954 = vmatprep.subr.mxu0 0.0
        %1955 = vmatpush1.msra.mxu0 0.0
        %1956 = vmatprep.subr.mxu0 0.0
        %1957 = vmatpush1.msra.mxu0 0.0
        %1958 = vmatprep.subr.mxu0 0.0
        %1959 = vmatpush1.msra.mxu0 0.0
        %1960 = vmatprep.subr.mxu0 0.0
        %1961 = vmatpush1.msra.mxu0 0.0
        %1962 = vmatprep.subr.mxu0 0.0
        %1963 = vmatpush1.msra.mxu0 0.0
        %1964 = vmatprep.subr.mxu0 0.0
        %1965 = vmatpush1.msra.mxu0 0.0
        %1966 = vmatprep.mubr.f32.mxu0 0.0
        %1967 = vmatmul.mubr.f32.gmra.mrb[0].mxu0 %v1885
        %v1968 = vpop.f32.mrb[0].mxu0
        %v1969 = vadd.f32 0.0, %v1968
        %v1970 = vpop.f32.mrb[0].mxu0
        %1971 = vmatprep.mubr.f32.mxu0 0.0
        %1972 = vmatmul.mubr.f32.gmra.mrb[0].mxu0 %v1888
        %v1973 = vpop.f32.mrb[0].mxu0
        %v1974 = vadd.f32 0.0, %v1973
        %v1975 = vpop.f32.mrb[0].mxu0
        %1976 = vmatprep.mubr.f32.mxu0 0.0
        %1977 = vmatmul.mubr.f32.gmra.mrb[0].mxu0 %v1891
        %v1978 = vpop.f32.mrb[0].mxu0
        %v1979 = vadd.f32 0.0, %v1978
        %v1980 = vpop.f32.mrb[0].mxu0
        %1981 = vmatprep.mubr.f32.mxu0 0.0
        %1982 = vmatmul.mubr.f32.gmra.mrb[0].mxu0 %v1894
        %v1983 = vpop.f32.mrb[0].mxu0
        %v1984 = vadd.f32 0.0, %v1983
        %v1985 = vpop.f32.mrb[0].mxu0
        %1986 = vmatprep.mubr.f32.mxu0 0.0
        %1987 = vmatmul.mubr.f32.gmra.mrb[0].mxu0 %v1897
        %v1988 = vpop.f32.mrb[0].mxu0
        %v1989 = vpop.f32.mrb[0].mxu0
        %v1990 = vadd.f32 0.0, %v1989
        %1991 = vmatprep.mubr.f32.mxu0 0.0
        %1992 = vmatmul.mubr.f32.gmra.mrb[0].mxu0 %v1900
        %v1993 = vpop.f32.mrb[0].mxu0
        %v1994 = vpop.f32.mrb[0].mxu0
        %v1995 = vadd.f32 0.0, %v1994
        %1996 = vdwg.mxu0
        %v1997 = vadd.f32 %v1794, %v1969
        %v1998 = vadd.f32 %v1795, %v1974
        %2001 = vrot.lane.b32.xlu0 %v1979, 64
        %v2002 = vpop.permute.xlu0 %2001
        %2003 = vrot.lane.b32.xlu0 %v1984, 64
        %v2004 = vpop.permute.xlu0 %2003
        %v2007 = vadd.f32 %v1997, %v2002
        %v2008 = vadd.f32 %v1998, %v2004
        %v2009 = vadd.f32 %v2007, %v1990
        %v2010 = vadd.f32 %v2008, %v1995
        %v2011 = vld [vmem:[%s3 + $0x118] sm:$0xff]
        %v2012 = vld [vmem:[%s3 + $0x120] sm:$0xff]
        %v2013 = vld [vmem:[%s3 + $0x158] sm:$0xff]
        %v2014 = vld [vmem:[%s3 + $0x160] sm:$0xff]
        %v2015 = vld [vmem:[%s3 + $0x198] sm:$0xff]
        %v2016 = vld [vmem:[%s3 + $0x1a0] sm:$0xff]
        %v2017 = vld [vmem:[%s3 + $0x1d8] sm:$0xff]
        %v2018 = vld [vmem:[%s3 + $0x1e0] sm:$0xff]
        %v2019 = vld [vmem:[%s3 + $0x218] sm:$0xff]
        %v2020 = vld [vmem:[%s3 + $0x220] sm:$0xff]
        %v2021 = vld [vmem:[%s3 + $0x258] sm:$0xff]
        %v2022 = vld [vmem:[%s3 + $0x260] sm:$0xff]
        %v2023 = vld [vmem:[%s3 + $0x298] sm:$0xff]
        %v2024 = vld [vmem:[%s3 + $0x2a0] sm:$0xff]
        %v2025 = vld [vmem:[%s3 + $0x2d8] sm:$0xff]
        %v2026 = vld [vmem:[%s3 + $0x2e0] sm:$0xff]
        %v2028 = vsel %vm285, %v1625, 0
        %v2031 = vsel %vm285, %v1630, 0
        %v2034 = vsel %vm285, %v1635, 0
        %v2037 = vsel %vm285, %v1640, 0
        %v2040 = vsel %vm285, %v1645, 0
        %v2043 = vsel %vm285, %v1650, 0
        %2045 = vmatprep.subr.mxu0 %v2012
        %2046 = vmatpush1.msra.mxu0 %v2011
        %2047 = vmatprep.subr.mxu0 %v2014
        %2048 = vmatpush1.msra.mxu0 %v2013
        %2049 = vmatprep.subr.mxu0 %v2016
        %2050 = vmatpush1.msra.mxu0 %v2015
        %2051 = vmatprep.subr.mxu0 %v2018
        %2052 = vmatpush1.msra.mxu0 %v2017
        %2053 = vmatprep.subr.mxu0 %v2020
        %2054 = vmatpush1.msra.mxu0 %v2019
        %2055 = vmatprep.subr.mxu0 %v2022
        %2056 = vmatpush1.msra.mxu0 %v2021
        %2057 = vmatprep.subr.mxu0 %v2024
        %2058 = vmatpush1.msra.mxu0 %v2023
        %2059 = vmatprep.subr.mxu0 %v2026
        %2060 = vmatpush1.msra.mxu0 %v2025
        %2061 = vmatprep.subr.mxu0 0.0
        %2062 = vmatpush1.msra.mxu0 0.0
        %2063 = vmatprep.subr.mxu0 0.0
        %2064 = vmatpush1.msra.mxu0 0.0
        %2065 = vmatprep.subr.mxu0 0.0
        %2066 = vmatpush1.msra.mxu0 0.0
        %2067 = vmatprep.subr.mxu0 0.0
        %2068 = vmatpush1.msra.mxu0 0.0
        %2069 = vmatprep.subr.mxu0 0.0
        %2070 = vmatpush1.msra.mxu0 0.0
        %2071 = vmatprep.subr.mxu0 0.0
        %2072 = vmatpush1.msra.mxu0 0.0
        %2073 = vmatprep.subr.mxu0 0.0
        %2074 = vmatpush1.msra.mxu0 0.0
        %2075 = vmatprep.subr.mxu0 0.0
        %2076 = vmatpush1.msra.mxu0 0.0
        %2077 = vmatprep.subr.mxu0 0.0
        %2078 = vmatpush1.msra.mxu0 0.0
        %2079 = vmatprep.subr.mxu0 0.0
        %2080 = vmatpush1.msra.mxu0 0.0
        %2081 = vmatprep.subr.mxu0 0.0
        %2082 = vmatpush1.msra.mxu0 0.0
        %2083 = vmatprep.subr.mxu0 0.0
        %2084 = vmatpush1.msra.mxu0 0.0
        %2085 = vmatprep.subr.mxu0 0.0
        %2086 = vmatpush1.msra.mxu0 0.0
        %2087 = vmatprep.subr.mxu0 0.0
        %2088 = vmatpush1.msra.mxu0 0.0
        %2089 = vmatprep.subr.mxu0 0.0
        %2090 = vmatpush1.msra.mxu0 0.0
        %2091 = vmatprep.subr.mxu0 0.0
        %2092 = vmatpush1.msra.mxu0 0.0
        %2093 = vmatprep.subr.mxu0 0.0
        %2094 = vmatpush1.msra.mxu0 0.0
        %2095 = vmatprep.subr.mxu0 0.0
        %2096 = vmatpush1.msra.mxu0 0.0
        %2097 = vmatprep.subr.mxu0 0.0
        %2098 = vmatpush1.msra.mxu0 0.0
        %2099 = vmatprep.subr.mxu0 0.0
        %2100 = vmatpush1.msra.mxu0 0.0
        %2101 = vmatprep.subr.mxu0 0.0
        %2102 = vmatpush1.msra.mxu0 0.0
        %2103 = vmatprep.subr.mxu0 0.0
        %2104 = vmatpush1.msra.mxu0 0.0
        %2105 = vmatprep.subr.mxu0 0.0
        %2106 = vmatpush1.msra.mxu0 0.0
        %2107 = vmatprep.subr.mxu0 0.0
        %2108 = vmatpush1.msra.mxu0 0.0
        %2109 = vmatprep.mubr.f32.mxu0 0.0
        %2110 = vmatmul.mubr.f32.gmra.mrb[0].mxu0 %v2028
        %v2111 = vpop.f32.mrb[0].mxu0
        %v2112 = vadd.f32 0.0, %v2111
        %v2113 = vpop.f32.mrb[0].mxu0
        %2114 = vmatprep.mubr.f32.mxu0 0.0
        %2115 = vmatmul.mubr.f32.gmra.mrb[0].mxu0 %v2031
        %v2116 = vpop.f32.mrb[0].mxu0
        %v2117 = vadd.f32 0.0, %v2116
        %v2118 = vpop.f32.mrb[0].mxu0
        %2119 = vmatprep.mubr.f32.mxu0 0.0
        %2120 = vmatmul.mubr.f32.gmra.mrb[0].mxu0 %v2034
        %v2121 = vpop.f32.mrb[0].mxu0
        %v2122 = vadd.f32 0.0, %v2121
        %v2123 = vpop.f32.mrb[0].mxu0
        %2124 = vmatprep.mubr.f32.mxu0 0.0
        %2125 = vmatmul.mubr.f32.gmra.mrb[0].mxu0 %v2037
        %v2126 = vpop.f32.mrb[0].mxu0
        %v2127 = vadd.f32 0.0, %v2126
        %v2128 = vpop.f32.mrb[0].mxu0
        %2129 = vmatprep.mubr.f32.mxu0 0.0
        %2130 = vmatmul.mubr.f32.gmra.mrb[0].mxu0 %v2040
        %v2131 = vpop.f32.mrb[0].mxu0
        %v2132 = vpop.f32.mrb[0].mxu0
        %v2133 = vadd.f32 0.0, %v2132
        %2134 = vmatprep.mubr.f32.mxu0 0.0
        %2135 = vmatmul.mubr.f32.gmra.mrb[0].mxu0 %v2043
        %v2136 = vpop.f32.mrb[0].mxu0
        %v2137 = vpop.f32.mrb[0].mxu0
        %v2138 = vadd.f32 0.0, %v2137
        %2139 = vdwg.mxu0
        %v2140 = vadd.f32 %v2009, %v2112
        %v2141 = vadd.f32 %v2010, %v2117
        %2144 = vrot.lane.b32.xlu0 %v2122, 64
        %v2145 = vpop.permute.xlu0 %2144
        %2146 = vrot.lane.b32.xlu0 %v2127, 64
        %v2147 = vpop.permute.xlu0 %2146
        %v2150 = vadd.f32 %v2140, %v2145
        %v2151 = vadd.f32 %v2141, %v2147
        %v2152 = vadd.f32 %v2150, %v2133
        %v2153 = vadd.f32 %v2151, %v2138
        %v2155 = vlaneseq
        %v2156 = vshrl.u32 %v2155, 7
        %v2157 = vsub.s32 0, %v2156
        %v2158 = vrot.slane %v1424, %v2157
        %v2160 = vadd.f32 %v2152, %v2158
        %v2161 = vadd.f32 %v2153, %v2158
        %v2162 = vmax.f32 %v2160, 0.0
        %v2163 = vmax.f32 %v2161, 0.0
        %v2164 = vlaneseq
        %v2165 = vshrl.u32 %v2164, 7
        %v2166 = vadd.s32 %v2165, 8
        %vm2167 = vcmp.lt.s32.totalorder %v2165, 9
        %vm2168 = vcmp.lt.s32.totalorder %v2166, 9
        %v2169 = vsel %vm2167, 1, 0
        %v2170 = vsel %vm2168, 1, 0
        %vm2171 = vcmp.eq.s32.totalorder %v2169, 1
        %vm2172 = vcmp.eq.s32.totalorder %v2170, 1
        %v2173 = vsel %vm2171, %v2162, 0.0
        %v2174 = vsel %vm2172, %v2163, 0.0
        %v2175 = vsel %vm285, %v2173, 0.0
        %v2176 = vsel %vm285, %v2174, 0.0
        %v2177 = vadd.f32 %v2175, %v2176
        %v2178 = vrot.slane %v2177, 4
        %v2179 = vadd.f32 %v2177, %v2178
        %v2180 = vrot.slane %v2179, 2
        %v2181 = vadd.f32 %v2179, %v2180
        %v2182 = vrot.slane %v2181, 1
        %v2183 = vadd.f32 %v2181, %v2182
        %v2184 = vmul.f32 %v2183, 0.11111111
        %v2185 = vld [vmem:[%s4 + $0x80] sm:$0xff]
        %v2186 = vld [vmem:[%s4 + $0x90] sm:$0xff]
        %v2187 = vld [vmem:[%s4 + $0xa0] sm:$0xff]
        %v2188 = vld [vmem:[%s4 + $0xb0] sm:$0xff]
        %v2189 = vld [vmem:[%s4 + $0xc0] sm:$0xff]
        %v2190 = vld [vmem:[%s4 + $0xd0] sm:$0xff]
        %v2191 = vld [vmem:[%s4 + $0xe0] sm:$0xff]
        %v2192 = vld [vmem:[%s4 + $0xf0] sm:$0xff]
        %v2193 = vld [vmem:[%s5 + $0x3] sm:$0x1]
        %v2195 = vsel %vm285, %v2184, 0
        %2197 = vmatprep.subr.mxu0 0.0
        %2198 = vmatpush1.msra.mxu0 %v2185
        %2199 = vmatprep.subr.mxu0 0.0
        %2200 = vmatpush1.msra.mxu0 %v2186
        %2201 = vmatprep.subr.mxu0 0.0
        %2202 = vmatpush1.msra.mxu0 %v2187
        %2203 = vmatprep.subr.mxu0 0.0
        %2204 = vmatpush1.msra.mxu0 %v2188
        %2205 = vmatprep.subr.mxu0 0.0
        %2206 = vmatpush1.msra.mxu0 %v2189
        %2207 = vmatprep.subr.mxu0 0.0
        %2208 = vmatpush1.msra.mxu0 %v2190
        %2209 = vmatprep.subr.mxu0 0.0
        %2210 = vmatpush1.msra.mxu0 %v2191
        %2211 = vmatprep.subr.mxu0 0.0
        %2212 = vmatpush1.msra.mxu0 %v2192
        %2213 = vmatprep.subr.mxu0 0.0
        %2214 = vmatpush1.msra.mxu0 0.0
        %2215 = vmatprep.subr.mxu0 0.0
        %2216 = vmatpush1.msra.mxu0 0.0
        %2217 = vmatprep.subr.mxu0 0.0
        %2218 = vmatpush1.msra.mxu0 0.0
        %2219 = vmatprep.subr.mxu0 0.0
        %2220 = vmatpush1.msra.mxu0 0.0
        %2221 = vmatprep.subr.mxu0 0.0
        %2222 = vmatpush1.msra.mxu0 0.0
        %2223 = vmatprep.subr.mxu0 0.0
        %2224 = vmatpush1.msra.mxu0 0.0
        %2225 = vmatprep.subr.mxu0 0.0
        %2226 = vmatpush1.msra.mxu0 0.0
        %2227 = vmatprep.subr.mxu0 0.0
        %2228 = vmatpush1.msra.mxu0 0.0
        %2229 = vmatprep.subr.mxu0 0.0
        %2230 = vmatpush1.msra.mxu0 0.0
        %2231 = vmatprep.subr.mxu0 0.0
        %2232 = vmatpush1.msra.mxu0 0.0
        %2233 = vmatprep.subr.mxu0 0.0
        %2234 = vmatpush1.msra.mxu0 0.0
        %2235 = vmatprep.subr.mxu0 0.0
        %2236 = vmatpush1.msra.mxu0 0.0
        %2237 = vmatprep.subr.mxu0 0.0
        %2238 = vmatpush1.msra.mxu0 0.0
        %2239 = vmatprep.subr.mxu0 0.0
        %2240 = vmatpush1.msra.mxu0 0.0
        %2241 = vmatprep.subr.mxu0 0.0
        %2242 = vmatpush1.msra.mxu0 0.0
        %2243 = vmatprep.subr.mxu0 0.0
        %2244 = vmatpush1.msra.mxu0 0.0
        %2245 = vmatprep.subr.mxu0 0.0
        %2246 = vmatpush1.msra.mxu0 0.0
        %2247 = vmatprep.subr.mxu0 0.0
        %2248 = vmatpush1.msra.mxu0 0.0
        %2249 = vmatprep.subr.mxu0 0.0
        %2250 = vmatpush1.msra.mxu0 0.0
        %2251 = vmatprep.subr.mxu0 0.0
        %2252 = vmatpush1.msra.mxu0 0.0
        %2253 = vmatprep.subr.mxu0 0.0
        %2254 = vmatpush1.msra.mxu0 0.0
        %2255 = vmatprep.subr.mxu0 0.0
        %2256 = vmatpush1.msra.mxu0 0.0
        %2257 = vmatprep.subr.mxu0 0.0
        %2258 = vmatpush1.msra.mxu0 0.0
        %2259 = vmatprep.subr.mxu0 0.0
        %2260 = vmatpush1.msra.mxu0 0.0
        %2261 = vmatprep.mubr.f32.mxu0 0.0
        %2262 = vmatmul.mubr.f32.gmra.mrb[0].mxu0 %v2195
        %v2263 = vpop.f32.mrb[0].mxu0
        %v2264 = vadd.f32 %v2193, %v2263
        %v2265 = vpop.f32.mrb[0].mxu0
        %2266 = vdwg.mxu0
        %v2267 = vmax.f32 %v2264, 0.0
        %v2268 = vld [vmem:[%s262] sm:$0x1]
        %v2269 = vld [vmem:[%s4 + $0x100] sm:$0xff]
        %v2270 = vld [vmem:[%s4 + $0x110] sm:$0xff]
        %v2271 = vld [vmem:[%s5 + $0x4] sm:$0x1]
        %v2273 = vsel %vm1443, %v2268, 0
        %2275 = vmatprep.subr.mxu0 0.0
        %2276 = vmatpush1.msra.mxu0 %v2269
        %2277 = vmatprep.subr.mxu0 0.0
        %2278 = vmatpush1.msra.mxu0 %v2270
        %2279 = vmatprep.subr.mxu0 0.0
        %2280 = vmatpush1.msra.mxu0 0.0
        %2281 = vmatprep.subr.mxu0 0.0
        %2282 = vmatpush1.msra.mxu0 0.0
        %2283 = vmatprep.subr.mxu0 0.0
        %2284 = vmatpush1.msra.mxu0 0.0
        %2285 = vmatprep.subr.mxu0 0.0
        %2286 = vmatpush1.msra.mxu0 0.0
        %2287 = vmatprep.subr.mxu0 0.0
        %2288 = vmatpush1.msra.mxu0 0.0
        %2289 = vmatprep.subr.mxu0 0.0
        %2290 = vmatpush1.msra.mxu0 0.0
        %2291 = vmatprep.subr.mxu0 0.0
        %2292 = vmatpush1.msra.mxu0 0.0
        %2293 = vmatprep.subr.mxu0 0.0
        %2294 = vmatpush1.msra.mxu0 0.0
        %2295 = vmatprep.subr.mxu0 0.0
        %2296 = vmatpush1.msra.mxu0 0.0
        %2297 = vmatprep.subr.mxu0 0.0
        %2298 = vmatpush1.msra.mxu0 0.0
        %2299 = vmatprep.subr.mxu0 0.0
        %2300 = vmatpush1.msra.mxu0 0.0
        %2301 = vmatprep.subr.mxu0 0.0
        %2302 = vmatpush1.msra.mxu0 0.0
        %2303 = vmatprep.subr.mxu0 0.0
        %2304 = vmatpush1.msra.mxu0 0.0
        %2305 = vmatprep.subr.mxu0 0.0
        %2306 = vmatpush1.msra.mxu0 0.0
        %2307 = vmatprep.subr.mxu0 0.0
        %2308 = vmatpush1.msra.mxu0 0.0
        %2309 = vmatprep.subr.mxu0 0.0
        %2310 = vmatpush1.msra.mxu0 0.0
        %2311 = vmatprep.subr.mxu0 0.0
        %2312 = vmatpush1.msra.mxu0 0.0
        %2313 = vmatprep.subr.mxu0 0.0
        %2314 = vmatpush1.msra.mxu0 0.0
        %2315 = vmatprep.subr.mxu0 0.0
        %2316 = vmatpush1.msra.mxu0 0.0
        %2317 = vmatprep.subr.mxu0 0.0
        %2318 = vmatpush1.msra.mxu0 0.0
        %2319 = vmatprep.subr.mxu0 0.0
        %2320 = vmatpush1.msra.mxu0 0.0
        %2321 = vmatprep.subr.mxu0 0.0
        %2322 = vmatpush1.msra.mxu0 0.0
        %2323 = vmatprep.subr.mxu0 0.0
        %2324 = vmatpush1.msra.mxu0 0.0
        %2325 = vmatprep.subr.mxu0 0.0
        %2326 = vmatpush1.msra.mxu0 0.0
        %2327 = vmatprep.subr.mxu0 0.0
        %2328 = vmatpush1.msra.mxu0 0.0
        %2329 = vmatprep.subr.mxu0 0.0
        %2330 = vmatpush1.msra.mxu0 0.0
        %2331 = vmatprep.subr.mxu0 0.0
        %2332 = vmatpush1.msra.mxu0 0.0
        %2333 = vmatprep.subr.mxu0 0.0
        %2334 = vmatpush1.msra.mxu0 0.0
        %2335 = vmatprep.subr.mxu0 0.0
        %2336 = vmatpush1.msra.mxu0 0.0
        %2337 = vmatprep.subr.mxu0 0.0
        %2338 = vmatpush1.msra.mxu0 0.0
        %2339 = vmatprep.mubr.f32.mxu0 0.0
        %2340 = vmatmul.mubr.f32.gmra.mrb[0].mxu0 %v2273
        %v2341 = vpop.f32.mrb[0].mxu0
        %v2342 = vadd.f32 %v2271, %v2341
        %v2343 = vpop.f32.mrb[0].mxu0
        %2344 = vdwg.mxu0
        %v2345 = vmax.f32 %v2342, 0.0
        %v2346 = vld [vmem:[%s4 + $0x120] sm:$0xff]
        %v2347 = vld [vmem:[%s4 + $0x130] sm:$0xff]
        %v2348 = vld [vmem:[%s4 + $0x140] sm:$0xff]
        %v2349 = vld [vmem:[%s4 + $0x150] sm:$0xff]
        %v2350 = vld [vmem:[%s4 + $0x160] sm:$0xff]
        %v2351 = vld [vmem:[%s4 + $0x170] sm:$0xff]
        %v2352 = vld [vmem:[%s4 + $0x180] sm:$0xff]
        %v2353 = vld [vmem:[%s4 + $0x190] sm:$0xff]
        %v2354 = vld [vmem:[%s5 + $0x5] sm:$0x1]
        %v2356 = vsel %vm285, %v2345, 0
        %2358 = vmatprep.subr.mxu0 0.0
        %2359 = vmatpush1.msra.mxu0 %v2346
        %2360 = vmatprep.subr.mxu0 0.0
        %2361 = vmatpush1.msra.mxu0 %v2347
        %2362 = vmatprep.subr.mxu0 0.0
        %2363 = vmatpush1.msra.mxu0 %v2348
        %2364 = vmatprep.subr.mxu0 0.0
        %2365 = vmatpush1.msra.mxu0 %v2349
        %2366 = vmatprep.subr.mxu0 0.0
        %2367 = vmatpush1.msra.mxu0 %v2350
        %2368 = vmatprep.subr.mxu0 0.0
        %2369 = vmatpush1.msra.mxu0 %v2351
        %2370 = vmatprep.subr.mxu0 0.0
        %2371 = vmatpush1.msra.mxu0 %v2352
        %2372 = vmatprep.subr.mxu0 0.0
        %2373 = vmatpush1.msra.mxu0 %v2353
        %2374 = vmatprep.subr.mxu0 0.0
        %2375 = vmatpush1.msra.mxu0 0.0
        %2376 = vmatprep.subr.mxu0 0.0
        %2377 = vmatpush1.msra.mxu0 0.0
        %2378 = vmatprep.subr.mxu0 0.0
        %2379 = vmatpush1.msra.mxu0 0.0
        %2380 = vmatprep.subr.mxu0 0.0
        %2381 = vmatpush1.msra.mxu0 0.0
        %2382 = vmatprep.subr.mxu0 0.0
        %2383 = vmatpush1.msra.mxu0 0.0
        %2384 = vmatprep.subr.mxu0 0.0
        %2385 = vmatpush1.msra.mxu0 0.0
        %2386 = vmatprep.subr.mxu0 0.0
        %2387 = vmatpush1.msra.mxu0 0.0
        %2388 = vmatprep.subr.mxu0 0.0
        %2389 = vmatpush1.msra.mxu0 0.0
        %2390 = vmatprep.subr.mxu0 0.0
        %2391 = vmatpush1.msra.mxu0 0.0
        %2392 = vmatprep.subr.mxu0 0.0
        %2393 = vmatpush1.msra.mxu0 0.0
        %2394 = vmatprep.subr.mxu0 0.0
        %2395 = vmatpush1.msra.mxu0 0.0
        %2396 = vmatprep.subr.mxu0 0.0
        %2397 = vmatpush1.msra.mxu0 0.0
        %2398 = vmatprep.subr.mxu0 0.0
        %2399 = vmatpush1.msra.mxu0 0.0
        %2400 = vmatprep.subr.mxu0 0.0
        %2401 = vmatpush1.msra.mxu0 0.0
        %2402 = vmatprep.subr.mxu0 0.0
        %2403 = vmatpush1.msra.mxu0 0.0
        %2404 = vmatprep.subr.mxu0 0.0
        %2405 = vmatpush1.msra.mxu0 0.0
        %2406 = vmatprep.subr.mxu0 0.0
        %2407 = vmatpush1.msra.mxu0 0.0
        %2408 = vmatprep.subr.mxu0 0.0
        %2409 = vmatpush1.msra.mxu0 0.0
        %2410 = vmatprep.subr.mxu0 0.0
        %2411 = vmatpush1.msra.mxu0 0.0
        %2412 = vmatprep.subr.mxu0 0.0
        %2413 = vmatpush1.msra.mxu0 0.0
        %2414 = vmatprep.subr.mxu0 0.0
        %2415 = vmatpush1.msra.mxu0 0.0
        %2416 = vmatprep.subr.mxu0 0.0
        %2417 = vmatpush1.msra.mxu0 0.0
        %2418 = vmatprep.subr.mxu0 0.0
        %2419 = vmatpush1.msra.mxu0 0.0
        %2420 = vmatprep.subr.mxu0 0.0
        %2421 = vmatpush1.msra.mxu0 0.0
        %2422 = vmatprep.mubr.f32.mxu0 0.0
        %2423 = vmatmul.mubr.f32.gmra.mrb[0].mxu0 %v2356
        %v2424 = vpop.f32.mrb[0].mxu0
        %v2425 = vadd.f32 %v2354, %v2424
        %v2426 = vpop.f32.mrb[0].mxu0
        %2427 = vdwg.mxu0
        %v2428 = vmax.f32 %v2425, 0.0
        %v2429 = vld [vmem:[%s4 + $0x1a0] sm:$0xff]
        %v2430 = vld [vmem:[%s4 + $0x1a8] sm:$0xff]
        %v2431 = vld [vmem:[%s4 + $0x1b0] sm:$0xff]
        %v2432 = vld [vmem:[%s4 + $0x1b8] sm:$0xff]
        %v2433 = vld [vmem:[%s4 + $0x1c0] sm:$0xff]
        %v2434 = vld [vmem:[%s4 + $0x1c8] sm:$0xff]
        %v2435 = vld [vmem:[%s4 + $0x1d0] sm:$0xff]
        %v2436 = vld [vmem:[%s4 + $0x1d8] sm:$0xff]
        %v2437 = vld [vmem:[%s4 + $0x1e0] sm:$0xff]
        %v2438 = vld [vmem:[%s4 + $0x1e8] sm:$0xff]
        %v2439 = vld [vmem:[%s4 + $0x1f0] sm:$0xff]
        %v2440 = vld [vmem:[%s4 + $0x1f8] sm:$0xff]
        %v2441 = vld [vmem:[%s4 + $0x200] sm:$0xff]
        %v2442 = vld [vmem:[%s4 + $0x208] sm:$0xff]
        %v2443 = vld [vmem:[%s4 + $0x210] sm:$0xff]
        %v2444 = vld [vmem:[%s4 + $0x218] sm:$0xff]
        %v2445 = vld [vmem:[%s4 + $0x220] sm:$0xff]
        %v2446 = vld [vmem:[%s4 + $0x228] sm:$0xff]
        %v2447 = vld [vmem:[%s4 + $0x230] sm:$0xff]
        %v2448 = vld [vmem:[%s4 + $0x238] sm:$0xff]
        %v2449 = vld [vmem:[%s4 + $0x240] sm:$0xff]
        %v2450 = vld [vmem:[%s4 + $0x248] sm:$0xff]
        %v2451 = vld [vmem:[%s4 + $0x250] sm:$0xff]
        %v2452 = vld [vmem:[%s4 + $0x258] sm:$0xff]
        %v2453 = vld [vmem:[%s4 + $0x260] sm:$0xff]
        %v2454 = vld [vmem:[%s4 + $0x268] sm:$0xff]
        %v2455 = vld [vmem:[%s4 + $0x270] sm:$0xff]
        %v2456 = vld [vmem:[%s4 + $0x278] sm:$0xff]
        %v2457 = vld [vmem:[%s4 + $0x280] sm:$0xff]
        %v2458 = vld [vmem:[%s4 + $0x288] sm:$0xff]
        %v2459 = vld [vmem:[%s4 + $0x290] sm:$0xff]
        %v2460 = vld [vmem:[%s4 + $0x298] sm:$0xff]
        %v2461 = vld [vmem:[%s4 + $0x2a0] sm:$0xff]
        %v2462 = vld [vmem:[%s4 + $0x2a8] sm:$0xff]
        %v2463 = vld [vmem:[%s4 + $0x2b0] sm:$0xff]
        %v2464 = vld [vmem:[%s4 + $0x2b8] sm:$0xff]
        %v2465 = vld [vmem:[%s4 + $0x2c0] sm:$0xff]
        %v2466 = vld [vmem:[%s4 + $0x2c8] sm:$0xff]
        %v2467 = vld [vmem:[%s4 + $0x2d0] sm:$0xff]
        %v2468 = vld [vmem:[%s4 + $0x2d8] sm:$0xff]
        %v2469 = vld [vmem:[%s4 + $0x2e0] sm:$0xff]
        %v2470 = vld [vmem:[%s4 + $0x2e8] sm:$0xff]
        %v2471 = vld [vmem:[%s4 + $0x2f0] sm:$0xff]
        %v2472 = vld [vmem:[%s4 + $0x2f8] sm:$0xff]
        %v2473 = vld [vmem:[%s4 + $0x300] sm:$0xff]
        %v2474 = vld [vmem:[%s4 + $0x308] sm:$0xff]
        %v2475 = vld [vmem:[%s4 + $0x310] sm:$0xff]
        %v2476 = vld [vmem:[%s4 + $0x318] sm:$0xff]
        %v2478 = vsel %vm285, %v2428, 0
        %2480 = vmatprep.subr.mxu0 %v2462
        %2481 = vmatpush1.msra.mxu0 %v2461
        %2482 = vmatprep.subr.mxu0 %v2464
        %2483 = vmatpush1.msra.mxu0 %v2463
        %2484 = vmatprep.subr.mxu0 %v2466
        %2485 = vmatpush1.msra.mxu0 %v2465
        %2486 = vmatprep.subr.mxu0 %v2468
        %2487 = vmatpush1.msra.mxu0 %v2467
        %2488 = vmatprep.subr.mxu0 %v2470
        %2489 = vmatpush1.msra.mxu0 %v2469
        %2490 = vmatprep.subr.mxu0 %v2472
        %2491 = vmatpush1.msra.mxu0 %v2471
        %2492 = vmatprep.subr.mxu0 %v2474
        %2493 = vmatpush1.msra.mxu0 %v2473
        %2494 = vmatprep.subr.mxu0 %v2476
        %2495 = vmatpush1.msra.mxu0 %v2475
        %2496 = vmatprep.subr.mxu0 0.0
        %2497 = vmatpush1.msra.mxu0 0.0
        %2498 = vmatprep.subr.mxu0 0.0
        %2499 = vmatpush1.msra.mxu0 0.0
        %2500 = vmatprep.subr.mxu0 0.0
        %2501 = vmatpush1.msra.mxu0 0.0
        %2502 = vmatprep.subr.mxu0 0.0
        %2503 = vmatpush1.msra.mxu0 0.0
        %2504 = vmatprep.subr.mxu0 0.0
        %2505 = vmatpush1.msra.mxu0 0.0
        %2506 = vmatprep.subr.mxu0 0.0
        %2507 = vmatpush1.msra.mxu0 0.0
        %2508 = vmatprep.subr.mxu0 0.0
        %2509 = vmatpush1.msra.mxu0 0.0
        %2510 = vmatprep.subr.mxu0 0.0
        %2511 = vmatpush1.msra.mxu0 0.0
        %2512 = vmatprep.subr.mxu0 0.0
        %2513 = vmatpush1.msra.mxu0 0.0
        %2514 = vmatprep.subr.mxu0 0.0
        %2515 = vmatpush1.msra.mxu0 0.0
        %2516 = vmatprep.subr.mxu0 0.0
        %2517 = vmatpush1.msra.mxu0 0.0
        %2518 = vmatprep.subr.mxu0 0.0
        %2519 = vmatpush1.msra.mxu0 0.0
        %2520 = vmatprep.subr.mxu0 0.0
        %2521 = vmatpush1.msra.mxu0 0.0
        %2522 = vmatprep.subr.mxu0 0.0
        %2523 = vmatpush1.msra.mxu0 0.0
        %2524 = vmatprep.subr.mxu0 0.0
        %2525 = vmatpush1.msra.mxu0 0.0
        %2526 = vmatprep.subr.mxu0 0.0
        %2527 = vmatpush1.msra.mxu0 0.0
        %2528 = vmatprep.subr.mxu0 0.0
        %2529 = vmatpush1.msra.mxu0 0.0
        %2530 = vmatprep.subr.mxu0 0.0
        %2531 = vmatpush1.msra.mxu0 0.0
        %2532 = vmatprep.subr.mxu0 0.0
        %2533 = vmatpush1.msra.mxu0 0.0
        %2534 = vmatprep.subr.mxu0 0.0
        %2535 = vmatpush1.msra.mxu0 0.0
        %2536 = vmatprep.subr.mxu0 0.0
        %2537 = vmatpush1.msra.mxu0 0.0
        %2538 = vmatprep.subr.mxu0 0.0
        %2539 = vmatpush1.msra.mxu0 0.0
        %2540 = vmatprep.subr.mxu0 0.0
        %2541 = vmatpush1.msra.mxu0 0.0
        %2542 = vmatprep.subr.mxu0 0.0
        %2543 = vmatpush1.msra.mxu0 0.0
        %2544 = vmatprep.mubr.f32.mxu0 0.0
        %2545 = vmatmul.mubr.f32.gmra.mrb[0].mxu0 %v2478
        %v2546 = vpop.f32.mrb[0].mxu0
        %v2547 = vadd.f32 0.0, %v2546
        %v2548 = vpop.f32.mrb[0].mxu0
        %v2549 = vadd.f32 0.0, %v2548
        %2550 = vdwg.mxu0
        %2551 = vmatprep.subr.mxu0 %v2430
        %2552 = vmatpush1.msra.mxu0 %v2429
        %2553 = vmatprep.subr.mxu0 %v2432
        %2554 = vmatpush1.msra.mxu0 %v2431
        %2555 = vmatprep.subr.mxu0 %v2434
        %2556 = vmatpush1.msra.mxu0 %v2433
        %2557 = vmatprep.subr.mxu0 %v2436
        %2558 = vmatpush1.msra.mxu0 %v2435
        %2559 = vmatprep.subr.mxu0 %v2438
        %2560 = vmatpush1.msra.mxu0 %v2437
        %2561 = vmatprep.subr.mxu0 %v2440
        %2562 = vmatpush1.msra.mxu0 %v2439
        %2563 = vmatprep.subr.mxu0 %v2442
        %2564 = vmatpush1.msra.mxu0 %v2441
        %2565 = vmatprep.subr.mxu0 %v2444
        %2566 = vmatpush1.msra.mxu0 %v2443
        %2567 = vmatprep.subr.mxu0 %v2446
        %2568 = vmatpush1.msra.mxu0 %v2445
        %2569 = vmatprep.subr.mxu0 %v2448
        %2570 = vmatpush1.msra.mxu0 %v2447
        %2571 = vmatprep.subr.mxu0 %v2450
        %2572 = vmatpush1.msra.mxu0 %v2449
        %2573 = vmatprep.subr.mxu0 %v2452
        %2574 = vmatpush1.msra.mxu0 %v2451
        %2575 = vmatprep.subr.mxu0 %v2454
        %2576 = vmatpush1.msra.mxu0 %v2453
        %2577 = vmatprep.subr.mxu0 %v2456
        %2578 = vmatpush1.msra.mxu0 %v2455
        %2579 = vmatprep.subr.mxu0 %v2458
        %2580 = vmatpush1.msra.mxu0 %v2457
        %2581 = vmatprep.subr.mxu0 %v2460
        %2582 = vmatpush1.msra.mxu0 %v2459
        %2583 = vmatprep.subr.mxu0 0.0
        %2584 = vmatpush1.msra.mxu0 0.0
        %2585 = vmatprep.subr.mxu0 0.0
        %2586 = vmatpush1.msra.mxu0 0.0
        %2587 = vmatprep.subr.mxu0 0.0
        %2588 = vmatpush1.msra.mxu0 0.0
        %2589 = vmatprep.subr.mxu0 0.0
        %2590 = vmatpush1.msra.mxu0 0.0
        %2591 = vmatprep.subr.mxu0 0.0
        %2592 = vmatpush1.msra.mxu0 0.0
        %2593 = vmatprep.subr.mxu0 0.0
        %2594 = vmatpush1.msra.mxu0 0.0
        %2595 = vmatprep.subr.mxu0 0.0
        %2596 = vmatpush1.msra.mxu0 0.0
        %2597 = vmatprep.subr.mxu0 0.0
        %2598 = vmatpush1.msra.mxu0 0.0
        %2599 = vmatprep.subr.mxu0 0.0
        %2600 = vmatpush1.msra.mxu0 0.0
        %2601 = vmatprep.subr.mxu0 0.0
        %2602 = vmatpush1.msra.mxu0 0.0
        %2603 = vmatprep.subr.mxu0 0.0
        %2604 = vmatpush1.msra.mxu0 0.0
        %2605 = vmatprep.subr.mxu0 0.0
        %2606 = vmatpush1.msra.mxu0 0.0
        %2607 = vmatprep.subr.mxu0 0.0
        %2608 = vmatpush1.msra.mxu0 0.0
        %2609 = vmatprep.subr.mxu0 0.0
        %2610 = vmatpush1.msra.mxu0 0.0
        %2611 = vmatprep.subr.mxu0 0.0
        %2612 = vmatpush1.msra.mxu0 0.0
        %2613 = vmatprep.subr.mxu0 0.0
        %2614 = vmatpush1.msra.mxu0 0.0
        %2615 = vmatprep.mubr.f32.mxu0 0.0
        %2616 = vmatmul.mubr.f32.gmra.mrb[0].mxu0 %v2267
        %v2617 = vpop.f32.mrb[0].mxu0
        %v2618 = vadd.f32 %v2547, %v2617
        %v2619 = vpop.f32.mrb[0].mxu0
        %v2620 = vadd.f32 %v2549, %v2619
        %2621 = vdwg.mxu0
        %v2622 = vld [vmem:[%s5 + $0x6] sm:$0x3]
        %v2624 = vlaneseq
        %v2625 = vshrl.u32 %v2624, 7
        %v2626 = vsub.s32 0, %v2625
        %v2627 = vrot.slane %v2622, %v2626
        %v2628 = vlaneseq
        %v2629 = vshrl.u32 %v2628, 7
        %v2630 = vsub.s32 1, %v2629
        %v2631 = vrot.slane %v2622, %v2630
        %v2634 = vadd.f32 %v2618, %v2627
        %v2635 = vadd.f32 %v2620, %v2631
        %v2636 = vmax.f32 %v2634, 0.0
        %v2637 = vmax.f32 %v2635, 0.0
        %v2638 = vld [vmem:[%s4 + $0x320] sm:$0xff]
        %v2639 = vld [vmem:[%s4 + $0x330] sm:$0xff]
        %v2640 = vld [vmem:[%s4 + $0x340] sm:$0xff]
        %v2641 = vld [vmem:[%s4 + $0x350] sm:$0xff]
        %v2642 = vld [vmem:[%s4 + $0x360] sm:$0xff]
        %v2643 = vld [vmem:[%s4 + $0x370] sm:$0xff]
        %v2644 = vld [vmem:[%s4 + $0x380] sm:$0xff]
        %v2645 = vld [vmem:[%s4 + $0x390] sm:$0xff]
        %v2646 = vld [vmem:[%s4 + $0x3a0] sm:$0xff]
        %v2647 = vld [vmem:[%s4 + $0x3b0] sm:$0xff]
        %v2648 = vld [vmem:[%s4 + $0x3c0] sm:$0xff]
        %v2649 = vld [vmem:[%s4 + $0x3d0] sm:$0xff]
        %v2650 = vld [vmem:[%s4 + $0x3e0] sm:$0xff]
        %v2651 = vld [vmem:[%s4 + $0x3f0] sm:$0xff]
        %v2652 = vld [vmem:[%s4 + $0x400] sm:$0xff]
        %v2653 = vld [vmem:[%s4 + $0x410] sm:$0xff]
        %v2654 = vld [vmem:[%s4 + $0x420] sm:$0xff]
        %v2655 = vld [vmem:[%s4 + $0x430] sm:$0xff]
        %v2656 = vld [vmem:[%s4 + $0x440] sm:$0xff]
        %v2657 = vld [vmem:[%s4 + $0x450] sm:$0xff]
        %v2658 = vld [vmem:[%s4 + $0x460] sm:$0xff]
        %v2659 = vld [vmem:[%s4 + $0x470] sm:$0xff]
        %v2660 = vld [vmem:[%s4 + $0x480] sm:$0xff]
        %v2661 = vld [vmem:[%s4 + $0x490] sm:$0xff]
        %v2662 = vld [vmem:[%s4 + $0x4a0] sm:$0xff]
        %v2663 = vld [vmem:[%s4 + $0x4b0] sm:$0xff]
        %v2664 = vld [vmem:[%s4 + $0x4c0] sm:$0xff]
        %v2665 = vld [vmem:[%s4 + $0x4d0] sm:$0xff]
        %v2666 = vld [vmem:[%s4 + $0x4e0] sm:$0xff]
        %v2667 = vld [vmem:[%s4 + $0x4f0] sm:$0xff]
        %v2668 = vld [vmem:[%s4 + $0x500] sm:$0xff]
        %v2669 = vld [vmem:[%s4 + $0x510] sm:$0xff]
        %v2670 = vld [vmem:[%s5 + $0x8] sm:$0x1]
        %2671 = vmatprep.subr.mxu0 0.0
        %2672 = vmatpush1.msra.mxu0 %v2638
        %2673 = vmatprep.subr.mxu0 0.0
        %2674 = vmatpush1.msra.mxu0 %v2639
        %2675 = vmatprep.subr.mxu0 0.0
        %2676 = vmatpush1.msra.mxu0 %v2640
        %2677 = vmatprep.subr.mxu0 0.0
        %2678 = vmatpush1.msra.mxu0 %v2641
        %2679 = vmatprep.subr.mxu0 0.0
        %2680 = vmatpush1.msra.mxu0 %v2642
        %2681 = vmatprep.subr.mxu0 0.0
        %2682 = vmatpush1.msra.mxu0 %v2643
        %2683 = vmatprep.subr.mxu0 0.0
        %2684 = vmatpush1.msra.mxu0 %v2644
        %2685 = vmatprep.subr.mxu0 0.0
        %2686 = vmatpush1.msra.mxu0 %v2645
        %2687 = vmatprep.subr.mxu0 0.0
        %2688 = vmatpush1.msra.mxu0 %v2646
        %2689 = vmatprep.subr.mxu0 0.0
        %2690 = vmatpush1.msra.mxu0 %v2647
        %2691 = vmatprep.subr.mxu0 0.0
        %2692 = vmatpush1.msra.mxu0 %v2648
        %2693 = vmatprep.subr.mxu0 0.0
        %2694 = vmatpush1.msra.mxu0 %v2649
        %2695 = vmatprep.subr.mxu0 0.0
        %2696 = vmatpush1.msra.mxu0 %v2650
        %2697 = vmatprep.subr.mxu0 0.0
        %2698 = vmatpush1.msra.mxu0 %v2651
        %2699 = vmatprep.subr.mxu0 0.0
        %2700 = vmatpush1.msra.mxu0 %v2652
        %2701 = vmatprep.subr.mxu0 0.0
        %2702 = vmatpush1.msra.mxu0 %v2653
        %2703 = vmatprep.subr.mxu0 0.0
        %2704 = vmatpush1.msra.mxu0 %v2654
        %2705 = vmatprep.subr.mxu0 0.0
        %2706 = vmatpush1.msra.mxu0 %v2655
        %2707 = vmatprep.subr.mxu0 0.0
        %2708 = vmatpush1.msra.mxu0 %v2656
        %2709 = vmatprep.subr.mxu0 0.0
        %2710 = vmatpush1.msra.mxu0 %v2657
        %2711 = vmatprep.subr.mxu0 0.0
        %2712 = vmatpush1.msra.mxu0 %v2658
        %2713 = vmatprep.subr.mxu0 0.0
        %2714 = vmatpush1.msra.mxu0 %v2659
        %2715 = vmatprep.subr.mxu0 0.0
        %2716 = vmatpush1.msra.mxu0 %v2660
        %2717 = vmatprep.subr.mxu0 0.0
        %2718 = vmatpush1.msra.mxu0 %v2661
        %2719 = vmatprep.subr.mxu0 0.0
        %2720 = vmatpush1.msra.mxu0 %v2662
        %2721 = vmatprep.subr.mxu0 0.0
        %2722 = vmatpush1.msra.mxu0 %v2663
        %2723 = vmatprep.subr.mxu0 0.0
        %2724 = vmatpush1.msra.mxu0 %v2664
        %2725 = vmatprep.subr.mxu0 0.0
        %2726 = vmatpush1.msra.mxu0 %v2665
        %2727 = vmatprep.subr.mxu0 0.0
        %2728 = vmatpush1.msra.mxu0 %v2666
        %2729 = vmatprep.subr.mxu0 0.0
        %2730 = vmatpush1.msra.mxu0 %v2667
        %2731 = vmatprep.subr.mxu0 0.0
        %2732 = vmatpush1.msra.mxu0 %v2668
        %2733 = vmatprep.subr.mxu0 0.0
        %2734 = vmatpush1.msra.mxu0 %v2669
        %2735 = vmatprep.mubr.f32.mxu0 %v2637
        %2736 = vmatmul.mubr.f32.gmra.mrb[0].mxu0 %v2636
        %v2737 = vpop.f32.mrb[0].mxu0
        %v2738 = vadd.f32 %v2670, %v2737
        %v2739 = vpop.f32.mrb[0].mxu0
        %2740 = vdwg.mxu0
        %v2741 = vtanh.pop %v2738
        %vm2742 = vcmask 8192
        %2743 = vst.msk [vmem:[%s254] sm:$0x1] %vm2742, %v2741
        %s2744 = sand.u32 %s164, 1
        %s2745 = scalar_lea.sflag [#allocation3], %s2744
        %s2746 = sand.u32 %s164, 1
        %s2747 = scalar_lea.vmem [#allocation2], %s2746
        // Predicated region
        $region45: #{improved_actor_forward.1} parent=43 // pred_check
          %p2748 = pneg %p174
        $region46: #{improved_actor_forward.1} parent=43 // pred_check_branch
          %2750 = sbr.rel (%p2748) target = $region48
        $region47: #{improved_actor_forward.1} parent=43 // pred_region
          %s2752 = ssub.s32 16, 16
          %2753 = vsyncadd %s2745, %s2752
          %s2754 = smul.addr %s20, 16
          %s2755 = scalar_lea.hbm %s6, %s2754
          %s2757 = sshll.u32 %s2747, 4
          %s2758 = int_to_ptr.vmem [resolvable:$true] %s2757
          %2760 = dma.vmem_to_hbm [thread:$0]  %s2758, 16, %s2755, %s2745
        $region48: #{improved_actor_forward.1} parent=43 // pred_fallthru
          _
      $region44: #{improved_actor_forward.1} parent=5 // pred_fallthru
        _
      %p2761 = scmp.le.s32.totalorder 2, %s15
      // Predicated region
      $region49: #{improved_actor_forward.1} parent=5 // pred_check
        %p2762 = pneg %p2761
      $region50: #{improved_actor_forward.1} parent=5 // pred_check_branch
        %2764 = sbr.rel (%p2762) target = $region52
      $region51: #{improved_actor_forward.1} parent=5 // pred_region
        %s2765 = ssub.s32 %s15, 2
        // Predicated region
        $region53: #{improved_actor_forward.1} parent=51 // pred_check
          %p2766 = pneg %p180
        $region54: #{improved_actor_forward.1} parent=51 // pred_check_branch
          %2768 = sbr.rel (%p2766) target = $region56
        $region55: #{improved_actor_forward.1} parent=51 // pred_region
          %s2769 = sand.u32 %s165, 1
          %s2770 = scalar_lea.sflag [#allocation3], %s2769
          %s2771 = sand.u32 %s165, 1
          %s2772 = scalar_lea.vmem [#allocation2], %s2771
          %2773 = dma.done %s2770, 16
        $region56: #{improved_actor_forward.1} parent=51 // pred_fallthru
          _
      $region52: #{improved_actor_forward.1} parent=5 // pred_fallthru
        _
    $region6: #{improved_actor_forward.1} parent=1 // loop_footer
      %s19 = sadd.s32 1, %s15
    $region7: #{improved_actor_forward.1} parent=1 // loop_footer_branch
      %14 = sbr.rel target = $region3
    $region8: #{improved_actor_forward.1} parent=1 // loop_exit
      _
    %2774 = vsyncpa [#allocation3], 1
    %s2775 = scalar_lea.sflag [#allocation3], 1
    %2776 = vsyncpa %s2775, 1

</llo_original>
